<compile_context>
chip_gen: v5e
topology: v5e:2x2
jax: 0.10.0
libtpu: 0.0.40
codegen_flags: <defaults>
</compile_context>

<pallas_src>
import functools

import jax
import jax.numpy as jnp
from jax.experimental import pallas as pl
from jax.experimental.pallas import tpu as pltpu

HP = 128                      # hidden dim zero-padded to one full vreg lane width
MXU_DTYPE = jnp.float32       # jnp.bfloat16 on v6e/v7x for faster recurrence


def _lstm_fc_kernel(x_ref, w_ih_ref, w_hh_ref, b_ref, fc_w_ref, fc_b_ref,
                    out_ref, hn_ref, cn_ref):
    """Single-invocation LSTM recurrence + FC head (everything fits in VMEM).

    x_ref:    (B, T)       input with the (I == 1) feature dim squeezed
    w_ih_ref: (1, 4*HP)    gate-padded W_ih.T row (I == 1)
    w_hh_ref: (HP, 4*HP)   gate-padded W_hh.T
    b_ref:    (1, 4*HP)    gate-padded bias_ih + bias_hh
    fc_w_ref: (HP, HP)     padded fc weight (real block: [:H, :O])
    fc_b_ref: (1, HP)      padded fc bias   (real: [:, :O])
    out_ref:  (B, HP)      fc output  (real: [:, :O])
    hn_ref:   (B, HP)      final h    (real: [:, :H])
    cn_ref:   (B, HP)      final c    (real: [:, :H])
    """
    B, T = x_ref.shape
    Hp = w_hh_ref.shape[0]

    x = x_ref[...]                                   # (B, T)
    w_ih_row = w_ih_ref[...]                         # (1, 4*Hp)
    bias = b_ref[...]                                # (1, 4*Hp)
    w_hh = w_hh_ref[...].astype(MXU_DTYPE)           # loaded/cast once, reused

    h = jnp.zeros((B, Hp), jnp.float32)
    c = jnp.zeros((B, Hp), jnp.float32)

    # T is small and static: fully unrolled, static lane-aligned slicing.
    # TODO(synk): for large T switch to lax.fori_loop with partial unroll and
    # pl.ds(pl.multiple_of(...)) row slices of a streamed gx block.
    for t in range(T):
        # Input projection (I == 1): a VPU broadcast multiply, not a matmul.
        gx_t = x[:, t:t + 1] * w_ih_row + bias       # (B, 4*Hp)
        # Single MXU matmul per step on the serial chain (K = 128).
        gates = gx_t + jnp.dot(h.astype(MXU_DTYPE), w_hh,
                               preferred_element_type=jnp.float32)
        # Two full-width EUP passes; gate slices are whole-vreg (128-lane
        # multiples) so they are free.
        sig = jax.nn.sigmoid(gates)
        th = jnp.tanh(gates)
        i = sig[:, 0 * Hp:1 * Hp]
        f = sig[:, 1 * Hp:2 * Hp]
        g = th[:, 2 * Hp:3 * Hp]
        o = sig[:, 3 * Hp:4 * Hp]
        c = f * c + i * g                            # padded lanes stay exactly 0
        h = o * jnp.tanh(c)

    hn_ref[...] = h
    cn_ref[...] = c
    out_ref[...] = (jnp.dot(h.astype(MXU_DTYPE), fc_w_ref[...].astype(MXU_DTYPE),
                            preferred_element_type=jnp.float32)
                    + fc_b_ref[...])


def prepare_params(params, hp=HP):
    """One-time weight re-layout: transpose and zero-pad each gate block from H
    to `hp` lanes. Run once at init, off the per-call path."""
    H = params["weight_hh"].shape[1]
    I = params["weight_ih"].shape[1]
    O = params["fc_w"].shape[0]
    assert I == 1, "kernel is specialized for input_size == 1"
    assert H <= hp and O <= hp

    def gate_pad_t(m):          # (4H, X) -> (X, 4*hp): transpose + per-gate pad
        X = m.shape[1]
        g = m.reshape(4, H, X).transpose(2, 0, 1)            # (X, 4, H)
        g = jnp.pad(g, ((0, 0), (0, 0), (0, hp - H)))
        return g.reshape(X, 4 * hp)

    w_ih = params["weight_ih"].astype(jnp.float32)            # (4H, 1)
    w_hh = params["weight_hh"].astype(jnp.float32)            # (4H, H)
    b = (params["bias_ih"] + params["bias_hh"]).astype(jnp.float32)  # (4H,)

    w_ih_row = gate_pad_t(w_ih)                                # (1, 4*hp)
    w_hh_p = jnp.pad(gate_pad_t(w_hh), ((0, hp - H), (0, 0)))  # (hp, 4*hp)
    b_row = gate_pad_t(b[:, None])                             # (1, 4*hp)

    fc_w_p = jnp.zeros((hp, hp), jnp.float32).at[:H, :O].set(
        params["fc_w"].astype(jnp.float32).T)
    fc_b_p = jnp.zeros((1, hp), jnp.float32).at[0, :O].set(
        params["fc_b"].astype(jnp.float32))

    return {"w_ih_row": w_ih_row, "w_hh_p": w_hh_p, "b_row": b_row,
            "fc_w_p": fc_w_p, "fc_b_p": fc_b_p}


@functools.partial(jax.jit, static_argnames=("hidden_size", "output_size"))
def lstm_model_forward(x, prep, hidden_size, output_size):
    """Equivalent of LSTM_model.forward(x) with h0/c0 = zeros.

    x: (B, T, 1) float32 (batch_first, like the PyTorch module).
    Returns (out, hn, cn) with shapes (B, O), (1, B, H), (1, B, H).
    """
    B, T, I = x.shape
    H, O = hidden_size, output_size
    hp = prep["w_hh_p"].shape[0]

    x2d = x[..., 0].astype(jnp.float32)                        # (B, T): I == 1

    out_p, hn_p, cn_p = pl.pallas_call(
        _lstm_fc_kernel,
        out_shape=(
            jax.ShapeDtypeStruct((B, hp), jnp.float32),
            jax.ShapeDtypeStruct((B, hp), jnp.float32),
            jax.ShapeDtypeStruct((B, hp), jnp.float32),
        ),
        in_specs=[pl.BlockSpec(memory_space=pltpu.MemorySpace.VMEM)] * 6,
        out_specs=(
            pl.BlockSpec(memory_space=pltpu.MemorySpace.VMEM),
            pl.BlockSpec(memory_space=pltpu.MemorySpace.VMEM),
            pl.BlockSpec(memory_space=pltpu.MemorySpace.VMEM),
        ),
    )(x2d, prep["w_ih_row"], prep["w_hh_p"], prep["b_row"],
      prep["fc_w_p"], prep["fc_b_p"])

    out = out_p[:, :O]
    hn = hn_p[:, :H][None]
    cn = cn_p[:, :H][None]
    return out, hn, cn


def _reference_forward(x, params):
    """Pure-JAX reference mirroring torch.nn.LSTM + Linear semantics."""
    B, T, I = x.shape
    H = params["weight_hh"].shape[1]
    hi = jax.lax.Precision.HIGHEST
    w_ih, w_hh = params["weight_ih"], params["weight_hh"]
    b = params["bias_ih"] + params["bias_hh"]
    h = jnp.zeros((B, H), jnp.float32)
    c = jnp.zeros((B, H), jnp.float32)
    for t in range(T):
        gates = (jnp.dot(x[:, t, :], w_ih.T, precision=hi)
                 + jnp.dot(h, w_hh.T, precision=hi) + b)
        i = jax.nn.sigmoid(gates[:, 0 * H:1 * H])
        f = jax.nn.sigmoid(gates[:, 1 * H:2 * H])
        g = jnp.tanh(gates[:, 2 * H:3 * H])
        o = jax.nn.sigmoid(gates[:, 3 * H:4 * H])
        c = f * c + i * g
        h = o * jnp.tanh(c)
    out = jnp.dot(h, params["fc_w"].T, precision=hi) + params["fc_b"]
    return out, h[None], c[None]


def init_params(key, input_size, hidden_size, output_size):
    """Deterministic init matching the PyTorch parameter shapes
    (uniform(-1/sqrt(H), 1/sqrt(H)), like torch defaults)."""
    k = 1.0 / jnp.sqrt(jnp.float32(hidden_size))
    keys = jax.random.split(key, 6)
    u = lambda kk, shape: jax.random.uniform(kk, shape, jnp.float32, -k, k)
    return {
        "weight_ih": u(keys[0], (4 * hidden_size, input_size)),
        "weight_hh": u(keys[1], (4 * hidden_size, hidden_size)),
        "bias_ih":   u(keys[2], (4 * hidden_size,)),
        "bias_hh":   u(keys[3], (4 * hidden_size,)),
        "fc_w":      u(keys[4], (output_size, hidden_size)),
        "fc_b":      u(keys[5], (output_size,)),
    }


if __name__ == "__main__":
    input_size = 1
    hidden_size = 16
    num_layers = 1
    output_size = 1

    batch = 2
    seq = 8

    key = jax.random.PRNGKey(0)
    pkey, xkey = jax.random.split(key)
    params = init_params(pkey, input_size, hidden_size, output_size)
    x = jax.random.normal(xkey, (batch, seq, input_size), jnp.float32)

    prep = prepare_params(params)                  # one-time weight re-layout
    out, hn, cn = lstm_model_forward(x, prep, hidden_size, output_size)
    jax.block_until_ready((out, hn, cn))

    ref_out, ref_hn, ref_cn = _reference_forward(x, params)
    assert out.shape == (batch, output_size)
    assert hn.shape == (num_layers, batch, hidden_size)
    assert cn.shape == (num_layers, batch, hidden_size)
    assert jnp.allclose(out, ref_out, atol=1e-4, rtol=1e-4)
    assert jnp.allclose(hn, ref_hn, atol=1e-4, rtol=1e-4)
    assert jnp.allclose(cn, ref_cn, atol=1e-4, rtol=1e-4)

    print("KERNEL_OK")
</pallas_src>

<mosaic_0001>
module attributes {stable_mosaic.version = 11 : i64} {
  func.func @_lstm_fc_kernel(%arg0: memref<2x8xf32, #tpu.memory_space<vmem>>, %arg1: memref<1x512xf32, #tpu.memory_space<vmem>>, %arg2: memref<128x512xf32, #tpu.memory_space<vmem>>, %arg3: memref<1x512xf32, #tpu.memory_space<vmem>>, %arg4: memref<128x128xf32, #tpu.memory_space<vmem>>, %arg5: memref<1x128xf32, #tpu.memory_space<vmem>>, %arg6: memref<2x128xf32, #tpu.memory_space<vmem>>, %arg7: memref<2x128xf32, #tpu.memory_space<vmem>>, %arg8: memref<2x128xf32, #tpu.memory_space<vmem>>) attributes {dimension_semantics = [], scalar_prefetch = 0 : i64, scratch_operands = 0 : i64, tpu.core_type = #tpu.core_type<tc>} {
    %c0 = arith.constant 0 : index
    %c0_0 = arith.constant 0 : index
    %0 = vector.load %arg0[%c0, %c0_0] : memref<2x8xf32, #tpu.memory_space<vmem>>, vector<2x8xf32>
    %c0_1 = arith.constant 0 : index
    %c0_2 = arith.constant 0 : index
    %1 = vector.load %arg1[%c0_1, %c0_2] : memref<1x512xf32, #tpu.memory_space<vmem>>, vector<1x512xf32>
    %c0_3 = arith.constant 0 : index
    %c0_4 = arith.constant 0 : index
    %2 = vector.load %arg3[%c0_3, %c0_4] : memref<1x512xf32, #tpu.memory_space<vmem>>, vector<1x512xf32>
    %c0_5 = arith.constant 0 : index
    %c0_6 = arith.constant 0 : index
    %3 = vector.load %arg2[%c0_5, %c0_6] : memref<128x512xf32, #tpu.memory_space<vmem>>, vector<128x512xf32>
    %cst = arith.constant 0.000000e+00 : f32
    %4 = vector.broadcast %cst : f32 to vector<2x128xf32>
    %cst_7 = arith.constant 0.000000e+00 : f32
    %5 = vector.broadcast %cst_7 : f32 to vector<2x128xf32>
    %6 = vector.extract_strided_slice %0 {offsets = [0, 0], sizes = [2, 1], strides = [1, 1]} : vector<2x8xf32> to vector<2x1xf32>
    %7 = vector.broadcast %6 : vector<2x1xf32> to vector<2x512xf32>
    %8 = vector.broadcast %1 : vector<1x512xf32> to vector<2x512xf32>
    %9 = arith.mulf %7, %8 : vector<2x512xf32>
    %10 = vector.broadcast %2 : vector<1x512xf32> to vector<2x512xf32>
    %11 = arith.addf %9, %10 : vector<2x512xf32>
    %cst_8 = arith.constant dense<0.000000e+00> : vector<2x512xf32>
    %12 = tpu.matmul %4, %3, %cst_8 {dimension_numbers = #tpu.dot_dimension_numbers<[1], [0], [0], [1], [0, 0, 1, 1], [], []>} : vector<2x128xf32>, vector<128x512xf32>, vector<2x512xf32> -> vector<2x512xf32>
    %13 = arith.addf %11, %12 : vector<2x512xf32>
    %14 = arith.negf %13 : vector<2x512xf32>
    %15 = math.exp %14 : vector<2x512xf32>
    %cst_9 = arith.constant 1.000000e+00 : f32
    %16 = vector.broadcast %cst_9 : f32 to vector<2x512xf32>
    %17 = arith.addf %16, %15 : vector<2x512xf32>
    %18 = arith.divf %16, %17 : vector<2x512xf32>
    %19 = math.tanh %13 : vector<2x512xf32>
    %20 = vector.extract_strided_slice %18 {offsets = [0, 0], sizes = [2, 128], strides = [1, 1]} : vector<2x512xf32> to vector<2x128xf32>
    %21 = vector.extract_strided_slice %18 {offsets = [0, 128], sizes = [2, 128], strides = [1, 1]} : vector<2x512xf32> to vector<2x128xf32>
    %22 = vector.extract_strided_slice %19 {offsets = [0, 256], sizes = [2, 128], strides = [1, 1]} : vector<2x512xf32> to vector<2x128xf32>
    %23 = vector.extract_strided_slice %18 {offsets = [0, 384], sizes = [2, 128], strides = [1, 1]} : vector<2x512xf32> to vector<2x128xf32>
    %24 = arith.mulf %21, %5 : vector<2x128xf32>
    %25 = arith.mulf %20, %22 : vector<2x128xf32>
    %26 = arith.addf %24, %25 : vector<2x128xf32>
    %27 = math.tanh %26 : vector<2x128xf32>
    %28 = arith.mulf %23, %27 : vector<2x128xf32>
    %29 = vector.extract_strided_slice %0 {offsets = [0, 1], sizes = [2, 1], strides = [1, 1]} : vector<2x8xf32> to vector<2x1xf32>
    %30 = vector.broadcast %29 : vector<2x1xf32> to vector<2x512xf32>
    %31 = vector.broadcast %1 : vector<1x512xf32> to vector<2x512xf32>
    %32 = arith.mulf %30, %31 : vector<2x512xf32>
    %33 = vector.broadcast %2 : vector<1x512xf32> to vector<2x512xf32>
    %34 = arith.addf %32, %33 : vector<2x512xf32>
    %cst_10 = arith.constant dense<0.000000e+00> : vector<2x512xf32>
    %35 = tpu.matmul %28, %3, %cst_10 {dimension_numbers = #tpu.dot_dimension_numbers<[1], [0], [0], [1], [0, 0, 1, 1], [], []>} : vector<2x128xf32>, vector<128x512xf32>, vector<2x512xf32> -> vector<2x512xf32>
    %36 = arith.addf %34, %35 : vector<2x512xf32>
    %37 = arith.negf %36 : vector<2x512xf32>
    %38 = math.exp %37 : vector<2x512xf32>
    %cst_11 = arith.constant 1.000000e+00 : f32
    %39 = vector.broadcast %cst_11 : f32 to vector<2x512xf32>
    %40 = arith.addf %39, %38 : vector<2x512xf32>
    %41 = arith.divf %39, %40 : vector<2x512xf32>
    %42 = math.tanh %36 : vector<2x512xf32>
    %43 = vector.extract_strided_slice %41 {offsets = [0, 0], sizes = [2, 128], strides = [1, 1]} : vector<2x512xf32> to vector<2x128xf32>
    %44 = vector.extract_strided_slice %41 {offsets = [0, 128], sizes = [2, 128], strides = [1, 1]} : vector<2x512xf32> to vector<2x128xf32>
    %45 = vector.extract_strided_slice %42 {offsets = [0, 256], sizes = [2, 128], strides = [1, 1]} : vector<2x512xf32> to vector<2x128xf32>
    %46 = vector.extract_strided_slice %41 {offsets = [0, 384], sizes = [2, 128], strides = [1, 1]} : vector<2x512xf32> to vector<2x128xf32>
    %47 = arith.mulf %44, %26 : vector<2x128xf32>
    %48 = arith.mulf %43, %45 : vector<2x128xf32>
    %49 = arith.addf %47, %48 : vector<2x128xf32>
    %50 = math.tanh %49 : vector<2x128xf32>
    %51 = arith.mulf %46, %50 : vector<2x128xf32>
    %52 = vector.extract_strided_slice %0 {offsets = [0, 2], sizes = [2, 1], strides = [1, 1]} : vector<2x8xf32> to vector<2x1xf32>
    %53 = vector.broadcast %52 : vector<2x1xf32> to vector<2x512xf32>
    %54 = vector.broadcast %1 : vector<1x512xf32> to vector<2x512xf32>
    %55 = arith.mulf %53, %54 : vector<2x512xf32>
    %56 = vector.broadcast %2 : vector<1x512xf32> to vector<2x512xf32>
    %57 = arith.addf %55, %56 : vector<2x512xf32>
    %cst_12 = arith.constant dense<0.000000e+00> : vector<2x512xf32>
    %58 = tpu.matmul %51, %3, %cst_12 {dimension_numbers = #tpu.dot_dimension_numbers<[1], [0], [0], [1], [0, 0, 1, 1], [], []>} : vector<2x128xf32>, vector<128x512xf32>, vector<2x512xf32> -> vector<2x512xf32>
    %59 = arith.addf %57, %58 : vector<2x512xf32>
    %60 = arith.negf %59 : vector<2x512xf32>
    %61 = math.exp %60 : vector<2x512xf32>
    %cst_13 = arith.constant 1.000000e+00 : f32
    %62 = vector.broadcast %cst_13 : f32 to vector<2x512xf32>
    %63 = arith.addf %62, %61 : vector<2x512xf32>
    %64 = arith.divf %62, %63 : vector<2x512xf32>
    %65 = math.tanh %59 : vector<2x512xf32>
    %66 = vector.extract_strided_slice %64 {offsets = [0, 0], sizes = [2, 128], strides = [1, 1]} : vector<2x512xf32> to vector<2x128xf32>
    %67 = vector.extract_strided_slice %64 {offsets = [0, 128], sizes = [2, 128], strides = [1, 1]} : vector<2x512xf32> to vector<2x128xf32>
    %68 = vector.extract_strided_slice %65 {offsets = [0, 256], sizes = [2, 128], strides = [1, 1]} : vector<2x512xf32> to vector<2x128xf32>
    %69 = vector.extract_strided_slice %64 {offsets = [0, 384], sizes = [2, 128], strides = [1, 1]} : vector<2x512xf32> to vector<2x128xf32>
    %70 = arith.mulf %67, %49 : vector<2x128xf32>
    %71 = arith.mulf %66, %68 : vector<2x128xf32>
    %72 = arith.addf %70, %71 : vector<2x128xf32>
    %73 = math.tanh %72 : vector<2x128xf32>
    %74 = arith.mulf %69, %73 : vector<2x128xf32>
    %75 = vector.extract_strided_slice %0 {offsets = [0, 3], sizes = [2, 1], strides = [1, 1]} : vector<2x8xf32> to vector<2x1xf32>
    %76 = vector.broadcast %75 : vector<2x1xf32> to vector<2x512xf32>
    %77 = vector.broadcast %1 : vector<1x512xf32> to vector<2x512xf32>
    %78 = arith.mulf %76, %77 : vector<2x512xf32>
    %79 = vector.broadcast %2 : vector<1x512xf32> to vector<2x512xf32>
    %80 = arith.addf %78, %79 : vector<2x512xf32>
    %cst_14 = arith.constant dense<0.000000e+00> : vector<2x512xf32>
    %81 = tpu.matmul %74, %3, %cst_14 {dimension_numbers = #tpu.dot_dimension_numbers<[1], [0], [0], [1], [0, 0, 1, 1], [], []>} : vector<2x128xf32>, vector<128x512xf32>, vector<2x512xf32> -> vector<2x512xf32>
    %82 = arith.addf %80, %81 : vector<2x512xf32>
    %83 = arith.negf %82 : vector<2x512xf32>
    %84 = math.exp %83 : vector<2x512xf32>
    %cst_15 = arith.constant 1.000000e+00 : f32
    %85 = vector.broadcast %cst_15 : f32 to vector<2x512xf32>
    %86 = arith.addf %85, %84 : vector<2x512xf32>
    %87 = arith.divf %85, %86 : vector<2x512xf32>
    %88 = math.tanh %82 : vector<2x512xf32>
    %89 = vector.extract_strided_slice %87 {offsets = [0, 0], sizes = [2, 128], strides = [1, 1]} : vector<2x512xf32> to vector<2x128xf32>
    %90 = vector.extract_strided_slice %87 {offsets = [0, 128], sizes = [2, 128], strides = [1, 1]} : vector<2x512xf32> to vector<2x128xf32>
    %91 = vector.extract_strided_slice %88 {offsets = [0, 256], sizes = [2, 128], strides = [1, 1]} : vector<2x512xf32> to vector<2x128xf32>
    %92 = vector.extract_strided_slice %87 {offsets = [0, 384], sizes = [2, 128], strides = [1, 1]} : vector<2x512xf32> to vector<2x128xf32>
    %93 = arith.mulf %90, %72 : vector<2x128xf32>
    %94 = arith.mulf %89, %91 : vector<2x128xf32>
    %95 = arith.addf %93, %94 : vector<2x128xf32>
    %96 = math.tanh %95 : vector<2x128xf32>
    %97 = arith.mulf %92, %96 : vector<2x128xf32>
    %98 = vector.extract_strided_slice %0 {offsets = [0, 4], sizes = [2, 1], strides = [1, 1]} : vector<2x8xf32> to vector<2x1xf32>
    %99 = vector.broadcast %98 : vector<2x1xf32> to vector<2x512xf32>
    %100 = vector.broadcast %1 : vector<1x512xf32> to vector<2x512xf32>
    %101 = arith.mulf %99, %100 : vector<2x512xf32>
    %102 = vector.broadcast %2 : vector<1x512xf32> to vector<2x512xf32>
    %103 = arith.addf %101, %102 : vector<2x512xf32>
    %cst_16 = arith.constant dense<0.000000e+00> : vector<2x512xf32>
    %104 = tpu.matmul %97, %3, %cst_16 {dimension_numbers = #tpu.dot_dimension_numbers<[1], [0], [0], [1], [0, 0, 1, 1], [], []>} : vector<2x128xf32>, vector<128x512xf32>, vector<2x512xf32> -> vector<2x512xf32>
    %105 = arith.addf %103, %104 : vector<2x512xf32>
    %106 = arith.negf %105 : vector<2x512xf32>
    %107 = math.exp %106 : vector<2x512xf32>
    %cst_17 = arith.constant 1.000000e+00 : f32
    %108 = vector.broadcast %cst_17 : f32 to vector<2x512xf32>
    %109 = arith.addf %108, %107 : vector<2x512xf32>
    %110 = arith.divf %108, %109 : vector<2x512xf32>
    %111 = math.tanh %105 : vector<2x512xf32>
    %112 = vector.extract_strided_slice %110 {offsets = [0, 0], sizes = [2, 128], strides = [1, 1]} : vector<2x512xf32> to vector<2x128xf32>
    %113 = vector.extract_strided_slice %110 {offsets = [0, 128], sizes = [2, 128], strides = [1, 1]} : vector<2x512xf32> to vector<2x128xf32>
    %114 = vector.extract_strided_slice %111 {offsets = [0, 256], sizes = [2, 128], strides = [1, 1]} : vector<2x512xf32> to vector<2x128xf32>
    %115 = vector.extract_strided_slice %110 {offsets = [0, 384], sizes = [2, 128], strides = [1, 1]} : vector<2x512xf32> to vector<2x128xf32>
    %116 = arith.mulf %113, %95 : vector<2x128xf32>
    %117 = arith.mulf %112, %114 : vector<2x128xf32>
    %118 = arith.addf %116, %117 : vector<2x128xf32>
    %119 = math.tanh %118 : vector<2x128xf32>
    %120 = arith.mulf %115, %119 : vector<2x128xf32>
    %121 = vector.extract_strided_slice %0 {offsets = [0, 5], sizes = [2, 1], strides = [1, 1]} : vector<2x8xf32> to vector<2x1xf32>
    %122 = vector.broadcast %121 : vector<2x1xf32> to vector<2x512xf32>
    %123 = vector.broadcast %1 : vector<1x512xf32> to vector<2x512xf32>
    %124 = arith.mulf %122, %123 : vector<2x512xf32>
    %125 = vector.broadcast %2 : vector<1x512xf32> to vector<2x512xf32>
    %126 = arith.addf %124, %125 : vector<2x512xf32>
    %cst_18 = arith.constant dense<0.000000e+00> : vector<2x512xf32>
    %127 = tpu.matmul %120, %3, %cst_18 {dimension_numbers = #tpu.dot_dimension_numbers<[1], [0], [0], [1], [0, 0, 1, 1], [], []>} : vector<2x128xf32>, vector<128x512xf32>, vector<2x512xf32> -> vector<2x512xf32>
    %128 = arith.addf %126, %127 : vector<2x512xf32>
    %129 = arith.negf %128 : vector<2x512xf32>
    %130 = math.exp %129 : vector<2x512xf32>
    %cst_19 = arith.constant 1.000000e+00 : f32
    %131 = vector.broadcast %cst_19 : f32 to vector<2x512xf32>
    %132 = arith.addf %131, %130 : vector<2x512xf32>
    %133 = arith.divf %131, %132 : vector<2x512xf32>
    %134 = math.tanh %128 : vector<2x512xf32>
    %135 = vector.extract_strided_slice %133 {offsets = [0, 0], sizes = [2, 128], strides = [1, 1]} : vector<2x512xf32> to vector<2x128xf32>
    %136 = vector.extract_strided_slice %133 {offsets = [0, 128], sizes = [2, 128], strides = [1, 1]} : vector<2x512xf32> to vector<2x128xf32>
    %137 = vector.extract_strided_slice %134 {offsets = [0, 256], sizes = [2, 128], strides = [1, 1]} : vector<2x512xf32> to vector<2x128xf32>
    %138 = vector.extract_strided_slice %133 {offsets = [0, 384], sizes = [2, 128], strides = [1, 1]} : vector<2x512xf32> to vector<2x128xf32>
    %139 = arith.mulf %136, %118 : vector<2x128xf32>
    %140 = arith.mulf %135, %137 : vector<2x128xf32>
    %141 = arith.addf %139, %140 : vector<2x128xf32>
    %142 = math.tanh %141 : vector<2x128xf32>
    %143 = arith.mulf %138, %142 : vector<2x128xf32>
    %144 = vector.extract_strided_slice %0 {offsets = [0, 6], sizes = [2, 1], strides = [1, 1]} : vector<2x8xf32> to vector<2x1xf32>
    %145 = vector.broadcast %144 : vector<2x1xf32> to vector<2x512xf32>
    %146 = vector.broadcast %1 : vector<1x512xf32> to vector<2x512xf32>
    %147 = arith.mulf %145, %146 : vector<2x512xf32>
    %148 = vector.broadcast %2 : vector<1x512xf32> to vector<2x512xf32>
    %149 = arith.addf %147, %148 : vector<2x512xf32>
    %cst_20 = arith.constant dense<0.000000e+00> : vector<2x512xf32>
    %150 = tpu.matmul %143, %3, %cst_20 {dimension_numbers = #tpu.dot_dimension_numbers<[1], [0], [0], [1], [0, 0, 1, 1], [], []>} : vector<2x128xf32>, vector<128x512xf32>, vector<2x512xf32> -> vector<2x512xf32>
    %151 = arith.addf %149, %150 : vector<2x512xf32>
    %152 = arith.negf %151 : vector<2x512xf32>
    %153 = math.exp %152 : vector<2x512xf32>
    %cst_21 = arith.constant 1.000000e+00 : f32
    %154 = vector.broadcast %cst_21 : f32 to vector<2x512xf32>
    %155 = arith.addf %154, %153 : vector<2x512xf32>
    %156 = arith.divf %154, %155 : vector<2x512xf32>
    %157 = math.tanh %151 : vector<2x512xf32>
    %158 = vector.extract_strided_slice %156 {offsets = [0, 0], sizes = [2, 128], strides = [1, 1]} : vector<2x512xf32> to vector<2x128xf32>
    %159 = vector.extract_strided_slice %156 {offsets = [0, 128], sizes = [2, 128], strides = [1, 1]} : vector<2x512xf32> to vector<2x128xf32>
    %160 = vector.extract_strided_slice %157 {offsets = [0, 256], sizes = [2, 128], strides = [1, 1]} : vector<2x512xf32> to vector<2x128xf32>
    %161 = vector.extract_strided_slice %156 {offsets = [0, 384], sizes = [2, 128], strides = [1, 1]} : vector<2x512xf32> to vector<2x128xf32>
    %162 = arith.mulf %159, %141 : vector<2x128xf32>
    %163 = arith.mulf %158, %160 : vector<2x128xf32>
    %164 = arith.addf %162, %163 : vector<2x128xf32>
    %165 = math.tanh %164 : vector<2x128xf32>
    %166 = arith.mulf %161, %165 : vector<2x128xf32>
    %167 = vector.extract_strided_slice %0 {offsets = [0, 7], sizes = [2, 1], strides = [1, 1]} : vector<2x8xf32> to vector<2x1xf32>
    %168 = vector.broadcast %167 : vector<2x1xf32> to vector<2x512xf32>
    %169 = vector.broadcast %1 : vector<1x512xf32> to vector<2x512xf32>
    %170 = arith.mulf %168, %169 : vector<2x512xf32>
    %171 = vector.broadcast %2 : vector<1x512xf32> to vector<2x512xf32>
    %172 = arith.addf %170, %171 : vector<2x512xf32>
    %cst_22 = arith.constant dense<0.000000e+00> : vector<2x512xf32>
    %173 = tpu.matmul %166, %3, %cst_22 {dimension_numbers = #tpu.dot_dimension_numbers<[1], [0], [0], [1], [0, 0, 1, 1], [], []>} : vector<2x128xf32>, vector<128x512xf32>, vector<2x512xf32> -> vector<2x512xf32>
    %174 = arith.addf %172, %173 : vector<2x512xf32>
    %175 = arith.negf %174 : vector<2x512xf32>
    %176 = math.exp %175 : vector<2x512xf32>
    %cst_23 = arith.constant 1.000000e+00 : f32
    %177 = vector.broadcast %cst_23 : f32 to vector<2x512xf32>
    %178 = arith.addf %177, %176 : vector<2x512xf32>
    %179 = arith.divf %177, %178 : vector<2x512xf32>
    %180 = math.tanh %174 : vector<2x512xf32>
    %181 = vector.extract_strided_slice %179 {offsets = [0, 0], sizes = [2, 128], strides = [1, 1]} : vector<2x512xf32> to vector<2x128xf32>
    %182 = vector.extract_strided_slice %179 {offsets = [0, 128], sizes = [2, 128], strides = [1, 1]} : vector<2x512xf32> to vector<2x128xf32>
    %183 = vector.extract_strided_slice %180 {offsets = [0, 256], sizes = [2, 128], strides = [1, 1]} : vector<2x512xf32> to vector<2x128xf32>
    %184 = vector.extract_strided_slice %179 {offsets = [0, 384], sizes = [2, 128], strides = [1, 1]} : vector<2x512xf32> to vector<2x128xf32>
    %185 = arith.mulf %182, %164 : vector<2x128xf32>
    %186 = arith.mulf %181, %183 : vector<2x128xf32>
    %187 = arith.addf %185, %186 : vector<2x128xf32>
    %188 = math.tanh %187 : vector<2x128xf32>
    %189 = arith.mulf %184, %188 : vector<2x128xf32>
    %c0_24 = arith.constant 0 : index
    %c0_25 = arith.constant 0 : index
    %190 = vector.load %arg7[%c0_24, %c0_25] : memref<2x128xf32, #tpu.memory_space<vmem>>, vector<2x128xf32>
    tpu.vector_store %arg7[%c0_24, %c0_25], %189 {strides = array<i32>} : memref<2x128xf32, #tpu.memory_space<vmem>>, vector<2x128xf32>,
    %c0_26 = arith.constant 0 : index
    %c0_27 = arith.constant 0 : index
    %191 = vector.load %arg8[%c0_26, %c0_27] : memref<2x128xf32, #tpu.memory_space<vmem>>, vector<2x128xf32>
    tpu.vector_store %arg8[%c0_26, %c0_27], %187 {strides = array<i32>} : memref<2x128xf32, #tpu.memory_space<vmem>>, vector<2x128xf32>,
    %c0_28 = arith.constant 0 : index
    %c0_29 = arith.constant 0 : index
    %192 = vector.load %arg4[%c0_28, %c0_29] : memref<128x128xf32, #tpu.memory_space<vmem>>, vector<128x128xf32>
    %cst_30 = arith.constant dense<0.000000e+00> : vector<2x128xf32>
    %193 = tpu.matmul %189, %192, %cst_30 {dimension_numbers = #tpu.dot_dimension_numbers<[1], [0], [0], [1], [0, 0, 1, 1], [], []>} : vector<2x128xf32>, vector<128x128xf32>, vector<2x128xf32> -> vector<2x128xf32>
    %c0_31 = arith.constant 0 : index
    %c0_32 = arith.constant 0 : index
    %194 = vector.load %arg5[%c0_31, %c0_32] : memref<1x128xf32, #tpu.memory_space<vmem>>, vector<1x128xf32>
    %195 = vector.broadcast %194 : vector<1x128xf32> to vector<2x128xf32>
    %196 = arith.addf %193, %195 : vector<2x128xf32>
    %c0_33 = arith.constant 0 : index
    %c0_34 = arith.constant 0 : index
    %197 = vector.load %arg6[%c0_33, %c0_34] : memref<2x128xf32, #tpu.memory_space<vmem>>, vector<2x128xf32>
    tpu.vector_store %arg6[%c0_33, %c0_34], %196 {strides = array<i32>} : memref<2x128xf32, #tpu.memory_space<vmem>>, vector<2x128xf32>,
    return
  }
}

</mosaic_0001>

<llo_original>
// kernel: lstm_model_forward.1
$region0: #{lstm_model_forward.1}
  #allocation0 [shape = 'u32[]', space=smem, size = 0x4, offset = 0x4, fixed_abs, tag = 'smem constant byte address 0x4 - core index']
  #allocation1 [shape = 'u32[72,128]{1,0:T(1,128)}', space=vmem, size = 0x9000, scoped, tag = 'internal scratch']
  %s0 = inlined_call_operand.hbm [shape: f32[2,8], index: 0, kind: input, shape index: {}]
  %s1 = inlined_call_operand.vmem [shape: f32[1,512], index: 1, kind: input, shape index: {}]
  %s2 = inlined_call_operand.hbm [shape: f32[128,512], index: 2, kind: input, shape index: {}]
  %s3 = inlined_call_operand.hbm [shape: f32[1,512], index: 3, kind: input, shape index: {}]
  %s4 = inlined_call_operand.hbm [shape: f32[128,128], index: 4, kind: input, shape index: {}]
  %s5 = inlined_call_operand.vmem [shape: f32[1,128], index: 5, kind: input, shape index: {}]
  %s6 = inlined_call_operand.vmem [shape: f32[2,128], index: 6, kind: output, shape index: {0}]
  %s7 = inlined_call_operand.vmem [shape: f32[2,128], index: 7, kind: output, shape index: {1}]
  %s8 = inlined_call_operand.vmem [shape: f32[2,128], index: 8, kind: output, shape index: {2}]
  %9 = xla_tuple %s6, %s7, %s8
  %s10 = sld [smem:[#allocation0]]
  $region66: #{lstm_model_forward.1} parent=0
    _
  %s12 = ssub.s32 1, %s10
  %s13 = scalar_select 0, %s12, %s10
  $region1: #{lstm_model_forward.1} parent=0
    #allocation2 [shape = 'u8[1024]{0}', space=vmem, size = 0x400, scoped, tag = 'input window, operand 0, single buffered']
    #allocation3 [shape = 's32[1]{0}', space=sflag, size = 0x4, scoped, tag = 'scoped memory for lstm_model_forward.1']
    #allocation4 [shape = 'u8[262144]{0}', space=vmem, size = 0x40000, scoped, tag = 'input window, operand 2, single buffered']
    #allocation5 [shape = 's32[1]{0}', space=sflag, size = 0x4, scoped, tag = 'scoped memory for lstm_model_forward.1']
    #allocation6 [shape = 'u8[2048]{0}', space=vmem, size = 0x800, scoped, tag = 'input window, operand 3, single buffered']
    #allocation7 [shape = 'u8[65536]{0}', space=vmem, size = 0x10000, scoped, tag = 'input window, operand 4, single buffered']
    #allocation8 [shape = 's32[1]{0}', space=sflag, size = 0x4, scoped, tag = 'scoped memory for lstm_model_forward.1']
    %14 = vsyncpa [#allocation3], 0
    %15 = vsyncpa [#allocation5], 0
    %16 = vsyncpa [#allocation8], 0
    // Predicated region
    $region2: #{lstm_model_forward.1} parent=1 // pred_check
      _
    $region3: #{lstm_model_forward.1} parent=1 // pred_check_branch
      %18 = sbr.rel (0) target = $region5
    $region4: #{lstm_model_forward.1} parent=1 // pred_region
      %20 = vsyncadd [#allocation3], 0
      %s22 = sshll.u32 %s0, 4
      %s23 = int_to_ptr.hbm [resolvable:$true] %s22
      %s24 = sshll.u32 [#allocation2], 4
      %s25 = int_to_ptr.vmem [resolvable:$true] %s24
      %27 = dma.hbm_to_vmem [thread:$0]  %s23, 32, %s25, [#allocation3]
    $region5: #{lstm_model_forward.1} parent=1 // pred_fallthru
      _
    // Predicated region
    $region6: #{lstm_model_forward.1} parent=1 // pred_check
      _
    $region7: #{lstm_model_forward.1} parent=1 // pred_check_branch
      %29 = sbr.rel (0) target = $region9
    $region8: #{lstm_model_forward.1} parent=1 // pred_region
      _
    $region9: #{lstm_model_forward.1} parent=1 // pred_fallthru
      _
    // Predicated region
    $region10: #{lstm_model_forward.1} parent=1 // pred_check
      _
    $region11: #{lstm_model_forward.1} parent=1 // pred_check_branch
      %31 = sbr.rel (0) target = $region13
    $region12: #{lstm_model_forward.1} parent=1 // pred_region
      %33 = vsyncadd [#allocation5], 0
      %s34 = sshll.u32 %s2, 4
      %s35 = int_to_ptr.hbm [resolvable:$true] %s34
      %s36 = sshll.u32 [#allocation4], 4
      %s37 = int_to_ptr.vmem [resolvable:$true] %s36
      %42 = dma.hbm_to_vmem [thread:$0]  %s35, 8192, %s37, [#allocation5], 512, 512, 32
    $region13: #{lstm_model_forward.1} parent=1 // pred_fallthru
      _
    // Predicated region
    $region14: #{lstm_model_forward.1} parent=1 // pred_check
      _
    $region15: #{lstm_model_forward.1} parent=1 // pred_check_branch
      %44 = sbr.rel (0) target = $region17
    $region16: #{lstm_model_forward.1} parent=1 // pred_region
      %46 = vsyncadd [#allocation5], 0
      %s48 = sshll.u32 %s3, 4
      %s49 = int_to_ptr.hbm [resolvable:$true] %s48
      %s50 = sshll.u32 [#allocation6], 4
      %s51 = int_to_ptr.vmem [resolvable:$true] %s50
      %53 = dma.hbm_to_vmem [thread:$0]  %s49, 64, %s51, [#allocation5]
    $region17: #{lstm_model_forward.1} parent=1 // pred_fallthru
      _
    // Predicated region
    $region18: #{lstm_model_forward.1} parent=1 // pred_check
      _
    $region19: #{lstm_model_forward.1} parent=1 // pred_check_branch
      %55 = sbr.rel (0) target = $region21
    $region20: #{lstm_model_forward.1} parent=1 // pred_region
      %57 = vsyncadd [#allocation8], 0
      %s58 = sshll.u32 %s4, 4
      %s59 = int_to_ptr.hbm [resolvable:$true] %s58
      %s60 = sshll.u32 [#allocation7], 4
      %s61 = int_to_ptr.vmem [resolvable:$true] %s60
      %66 = dma.hbm_to_vmem [thread:$0]  %s59, 2048, %s61, [#allocation8], 128, 128, 8
    $region21: #{lstm_model_forward.1} parent=1 // pred_fallthru
      _
    // Predicated region
    $region22: #{lstm_model_forward.1} parent=1 // pred_check
      _
    $region23: #{lstm_model_forward.1} parent=1 // pred_check_branch
      %68 = sbr.rel (0) target = $region25
    $region24: #{lstm_model_forward.1} parent=1 // pred_region
      _
    $region25: #{lstm_model_forward.1} parent=1 // pred_fallthru
      _
    // Predicated region
    $region26: #{lstm_model_forward.1} parent=1 // pred_check
      _
    $region27: #{lstm_model_forward.1} parent=1 // pred_check_branch
      %70 = sbr.rel (0) target = $region29
    $region28: #{lstm_model_forward.1} parent=1 // pred_region
      %72 = dma.done [#allocation3], 32
    $region29: #{lstm_model_forward.1} parent=1 // pred_fallthru
      _
    // Predicated region
    $region30: #{lstm_model_forward.1} parent=1 // pred_check
      _
    $region31: #{lstm_model_forward.1} parent=1 // pred_check_branch
      %74 = sbr.rel (0) target = $region33
    $region32: #{lstm_model_forward.1} parent=1 // pred_region
      %76 = dma.done [#allocation5], 8192
    $region33: #{lstm_model_forward.1} parent=1 // pred_fallthru
      _
    // Predicated region
    $region34: #{lstm_model_forward.1} parent=1 // pred_check
      _
    $region35: #{lstm_model_forward.1} parent=1 // pred_check_branch
      %78 = sbr.rel (0) target = $region37
    $region36: #{lstm_model_forward.1} parent=1 // pred_region
      %80 = dma.done [#allocation5], 64
    $region37: #{lstm_model_forward.1} parent=1 // pred_fallthru
      _
    // Predicated region
    $region38: #{lstm_model_forward.1} parent=1 // pred_check
      _
    $region39: #{lstm_model_forward.1} parent=1 // pred_check_branch
      %82 = sbr.rel (0) target = $region41
    $region40: #{lstm_model_forward.1} parent=1 // pred_region
      %84 = dma.done [#allocation8], 2048
    $region41: #{lstm_model_forward.1} parent=1 // pred_fallthru
      _
    %v85 = vld [vmem:[#allocation2] sm:$0x3]
    %v86 = vld [vmem:[%s1] sm:$0xf]
    %v87 = vld [vmem:[#allocation6] sm:$0xf]
    %v88 = vld [vmem:[#allocation4] sm:$0xff]
    %v89 = vld [vmem:[#allocation4 + $0x8] sm:$0xff]
    %v90 = vld [vmem:[#allocation4 + $0x10] sm:$0xff]
    %v91 = vld [vmem:[#allocation4 + $0x18] sm:$0xff]
    %v92 = vld [vmem:[#allocation4 + $0x20] sm:$0xff]
    %v93 = vld [vmem:[#allocation4 + $0x28] sm:$0xff]
    %v94 = vld [vmem:[#allocation4 + $0x30] sm:$0xff]
    %v95 = vld [vmem:[#allocation4 + $0x38] sm:$0xff]
    %v96 = vld [vmem:[#allocation4 + $0x40] sm:$0xff]
    %v97 = vld [vmem:[#allocation4 + $0x48] sm:$0xff]
    %v98 = vld [vmem:[#allocation4 + $0x50] sm:$0xff]
    %v99 = vld [vmem:[#allocation4 + $0x58] sm:$0xff]
    %v100 = vld [vmem:[#allocation4 + $0x60] sm:$0xff]
    %v101 = vld [vmem:[#allocation4 + $0x68] sm:$0xff]
    %v102 = vld [vmem:[#allocation4 + $0x70] sm:$0xff]
    %v103 = vld [vmem:[#allocation4 + $0x78] sm:$0xff]
    %v104 = vld [vmem:[#allocation4 + $0x80] sm:$0xff]
    %v105 = vld [vmem:[#allocation4 + $0x88] sm:$0xff]
    %v106 = vld [vmem:[#allocation4 + $0x90] sm:$0xff]
    %v107 = vld [vmem:[#allocation4 + $0x98] sm:$0xff]
    %v108 = vld [vmem:[#allocation4 + $0xa0] sm:$0xff]
    %v109 = vld [vmem:[#allocation4 + $0xa8] sm:$0xff]
    %v110 = vld [vmem:[#allocation4 + $0xb0] sm:$0xff]
    %v111 = vld [vmem:[#allocation4 + $0xb8] sm:$0xff]
    %v112 = vld [vmem:[#allocation4 + $0xc0] sm:$0xff]
    %v113 = vld [vmem:[#allocation4 + $0xc8] sm:$0xff]
    %v114 = vld [vmem:[#allocation4 + $0xd0] sm:$0xff]
    %v115 = vld [vmem:[#allocation4 + $0xd8] sm:$0xff]
    %v116 = vld [vmem:[#allocation4 + $0xe0] sm:$0xff]
    %v117 = vld [vmem:[#allocation4 + $0xe8] sm:$0xff]
    %v118 = vld [vmem:[#allocation4 + $0xf0] sm:$0xff]
    %v119 = vld [vmem:[#allocation4 + $0xf8] sm:$0xff]
    %v120 = vld [vmem:[#allocation4 + $0x100] sm:$0xff]
    %v121 = vld [vmem:[#allocation4 + $0x108] sm:$0xff]
    %v122 = vld [vmem:[#allocation4 + $0x110] sm:$0xff]
    %v123 = vld [vmem:[#allocation4 + $0x118] sm:$0xff]
    %v124 = vld [vmem:[#allocation4 + $0x120] sm:$0xff]
    %v125 = vld [vmem:[#allocation4 + $0x128] sm:$0xff]
    %v126 = vld [vmem:[#allocation4 + $0x130] sm:$0xff]
    %v127 = vld [vmem:[#allocation4 + $0x138] sm:$0xff]
    %v128 = vld [vmem:[#allocation4 + $0x140] sm:$0xff]
    %v129 = vld [vmem:[#allocation4 + $0x148] sm:$0xff]
    %v130 = vld [vmem:[#allocation4 + $0x150] sm:$0xff]
    %v131 = vld [vmem:[#allocation4 + $0x158] sm:$0xff]
    %v132 = vld [vmem:[#allocation4 + $0x160] sm:$0xff]
    %v133 = vld [vmem:[#allocation4 + $0x168] sm:$0xff]
    %v134 = vld [vmem:[#allocation4 + $0x170] sm:$0xff]
    %v135 = vld [vmem:[#allocation4 + $0x178] sm:$0xff]
    %v136 = vld [vmem:[#allocation4 + $0x180] sm:$0xff]
    %v137 = vld [vmem:[#allocation4 + $0x188] sm:$0xff]
    %v138 = vld [vmem:[#allocation4 + $0x190] sm:$0xff]
    %v139 = vld [vmem:[#allocation4 + $0x198] sm:$0xff]
    %v140 = vld [vmem:[#allocation4 + $0x1a0] sm:$0xff]
    %v141 = vld [vmem:[#allocation4 + $0x1a8] sm:$0xff]
    %v142 = vld [vmem:[#allocation4 + $0x1b0] sm:$0xff]
    %v143 = vld [vmem:[#allocation4 + $0x1b8] sm:$0xff]
    %v144 = vld [vmem:[#allocation4 + $0x1c0] sm:$0xff]
    %v145 = vld [vmem:[#allocation4 + $0x1c8] sm:$0xff]
    %v146 = vld [vmem:[#allocation4 + $0x1d0] sm:$0xff]
    %v147 = vld [vmem:[#allocation4 + $0x1d8] sm:$0xff]
    %v148 = vld [vmem:[#allocation4 + $0x1e0] sm:$0xff]
    %v149 = vld [vmem:[#allocation4 + $0x1e8] sm:$0xff]
    %v150 = vld [vmem:[#allocation4 + $0x1f0] sm:$0xff]
    %v151 = vld [vmem:[#allocation4 + $0x1f8] sm:$0xff]
    %153 = vset.pattern.permute.xlu0 0
    %154 = vperm.xlu0 %153, %v85
    %v155 = vpop.permute.xlu0 %154
    %v158 = vperm.slane %v86, 0
    %v159 = vperm.slane %v86, 1
    %v160 = vperm.slane %v86, 2
    %v161 = vperm.slane %v86, 3
    %v166 = vmul.f32 %v155, %v158
    %v167 = vmul.f32 %v155, %v159
    %v168 = vmul.f32 %v155, %v160
    %v169 = vmul.f32 %v155, %v161
    %v171 = vperm.slane %v87, 0
    %v172 = vperm.slane %v87, 1
    %v173 = vperm.slane %v87, 2
    %v174 = vperm.slane %v87, 3
    %v179 = vadd.f32 %v166, %v171
    %v180 = vadd.f32 %v167, %v172
    %v181 = vadd.f32 %v168, %v173
    %v182 = vadd.f32 %v169, %v174
    %183 = vmatpush.msra.mxu0 %v148
    %184 = vmatpush.msra.mxu0 %v144
    %185 = vmatpush.msra.mxu0 %v140
    %186 = vmatpush.msra.mxu0 %v136
    %187 = vmatpush.msra.mxu0 %v132
    %188 = vmatpush.msra.mxu0 %v128
    %189 = vmatpush.msra.mxu0 %v124
    %190 = vmatpush.msra.mxu0 %v120
    %191 = vmatpush.msra.mxu0 %v116
    %192 = vmatpush.msra.mxu0 %v112
    %193 = vmatpush.msra.mxu0 %v108
    %194 = vmatpush.msra.mxu0 %v104
    %195 = vmatpush.msra.mxu0 %v100
    %196 = vmatpush.msra.mxu0 %v96
    %197 = vmatpush.msra.mxu0 %v92
    %198 = vmatpush.msra.mxu0 %v88
    %199 = vmatmul.f32.gmra.mxu0 0.0
    %v200 = vpop.f32.mrf.mxu0
    %v201 = vadd.f32 0.0, %v200
    %202 = vdwg.mxu0
    %203 = vmatpush.msra.mxu0 %v149
    %204 = vmatpush.msra.mxu0 %v145
    %205 = vmatpush.msra.mxu0 %v141
    %206 = vmatpush.msra.mxu0 %v137
    %207 = vmatpush.msra.mxu0 %v133
    %208 = vmatpush.msra.mxu0 %v129
    %209 = vmatpush.msra.mxu0 %v125
    %210 = vmatpush.msra.mxu0 %v121
    %211 = vmatpush.msra.mxu0 %v117
    %212 = vmatpush.msra.mxu0 %v113
    %213 = vmatpush.msra.mxu0 %v109
    %214 = vmatpush.msra.mxu0 %v105
    %215 = vmatpush.msra.mxu0 %v101
    %216 = vmatpush.msra.mxu0 %v97
    %217 = vmatpush.msra.mxu0 %v93
    %218 = vmatpush.msra.mxu0 %v89
    %219 = vmatmul.f32.gmra.mxu0 0.0
    %v220 = vpop.f32.mrf.mxu0
    %v221 = vadd.f32 0.0, %v220
    %222 = vdwg.mxu0
    %223 = vmatpush.msra.mxu0 %v150
    %224 = vmatpush.msra.mxu0 %v146
    %225 = vmatpush.msra.mxu0 %v142
    %226 = vmatpush.msra.mxu0 %v138
    %227 = vmatpush.msra.mxu0 %v134
    %228 = vmatpush.msra.mxu0 %v130
    %229 = vmatpush.msra.mxu0 %v126
    %230 = vmatpush.msra.mxu0 %v122
    %231 = vmatpush.msra.mxu0 %v118
    %232 = vmatpush.msra.mxu0 %v114
    %233 = vmatpush.msra.mxu0 %v110
    %234 = vmatpush.msra.mxu0 %v106
    %235 = vmatpush.msra.mxu0 %v102
    %236 = vmatpush.msra.mxu0 %v98
    %237 = vmatpush.msra.mxu0 %v94
    %238 = vmatpush.msra.mxu0 %v90
    %239 = vmatmul.f32.gmra.mxu0 0.0
    %v240 = vpop.f32.mrf.mxu0
    %v241 = vadd.f32 0.0, %v240
    %242 = vdwg.mxu0
    %243 = vmatpush.msra.mxu0 %v151
    %244 = vmatpush.msra.mxu0 %v147
    %245 = vmatpush.msra.mxu0 %v143
    %246 = vmatpush.msra.mxu0 %v139
    %247 = vmatpush.msra.mxu0 %v135
    %248 = vmatpush.msra.mxu0 %v131
    %249 = vmatpush.msra.mxu0 %v127
    %250 = vmatpush.msra.mxu0 %v123
    %251 = vmatpush.msra.mxu0 %v119
    %252 = vmatpush.msra.mxu0 %v115
    %253 = vmatpush.msra.mxu0 %v111
    %254 = vmatpush.msra.mxu0 %v107
    %255 = vmatpush.msra.mxu0 %v103
    %256 = vmatpush.msra.mxu0 %v99
    %257 = vmatpush.msra.mxu0 %v95
    %258 = vmatpush.msra.mxu0 %v91
    %259 = vmatmul.f32.gmra.mxu0 0.0
    %v260 = vpop.f32.mrf.mxu0
    %v261 = vadd.f32 0.0, %v260
    %262 = vdwg.mxu0
    %v263 = vadd.f32 %v179, %v201
    %v264 = vadd.f32 %v180, %v221
    %v265 = vadd.f32 %v181, %v241
    %v266 = vadd.f32 %v182, %v261
    %v267 = vxor.u32 %v263, 2147483648
    %v268 = vxor.u32 %v264, 2147483648
    %v269 = vxor.u32 %v266, 2147483648
    %v270 = vmul.f32 %v267, 1.442695
    %v271 = vpow.pop %v270
    %v272 = vmul.f32 %v268, 1.442695
    %v273 = vpow.pop %v272
    %v274 = vmul.f32 %v269, 1.442695
    %v275 = vpow.pop %v274
    %v276 = vadd.f32 %v271, 1.0
    %v277 = vadd.f32 %v273, 1.0
    %v278 = vadd.f32 %v275, 1.0
    %v279 = vrcp.pop %v276
    %v280 = vmul.f32 %v276, %v279
    %v281 = vsub.f32 1.0, %v280
    %v282 = vmul.f32 %v279, %v281
    %v283 = vadd.f32 %v279, %v282
    %vm284 = vweird.f32 %v276
    %vm285 = vweird.f32 %v279
    %vm286 = vmor %vm284, %vm285
    %v287 = vsel %vm286, %v279, %v283
    %v288 = vand.u32 2147483647, %v276
    %vm289 = vcmp.eq.f32.partialorder %v288, 8.507059e+37
    %v290 = vand.u32 %v276, 2147483648
    %v291 = vor.u32 1.1754944e-38, %v290
    %v292 = vsel %vm289, %v291, %v287
    %v293 = vmul.f32 1.0, %v292
    %v294 = vrcp.pop %v277
    %v295 = vmul.f32 %v277, %v294
    %v296 = vsub.f32 1.0, %v295
    %v297 = vmul.f32 %v294, %v296
    %v298 = vadd.f32 %v294, %v297
    %vm299 = vweird.f32 %v277
    %vm300 = vweird.f32 %v294
    %vm301 = vmor %vm299, %vm300
    %v302 = vsel %vm301, %v294, %v298
    %v303 = vand.u32 2147483647, %v277
    %vm304 = vcmp.eq.f32.partialorder %v303, 8.507059e+37
    %v305 = vand.u32 %v277, 2147483648
    %v306 = vor.u32 1.1754944e-38, %v305
    %v307 = vsel %vm304, %v306, %v302
    %v308 = vmul.f32 1.0, %v307
    %v309 = vrcp.pop %v278
    %v310 = vmul.f32 %v278, %v309
    %v311 = vsub.f32 1.0, %v310
    %v312 = vmul.f32 %v309, %v311
    %v313 = vadd.f32 %v309, %v312
    %vm314 = vweird.f32 %v278
    %vm315 = vweird.f32 %v309
    %vm316 = vmor %vm314, %vm315
    %v317 = vsel %vm316, %v309, %v313
    %v318 = vand.u32 2147483647, %v278
    %vm319 = vcmp.eq.f32.partialorder %v318, 8.507059e+37
    %v320 = vand.u32 %v278, 2147483648
    %v321 = vor.u32 1.1754944e-38, %v320
    %v322 = vsel %vm319, %v321, %v317
    %v323 = vmul.f32 1.0, %v322
    %v324 = vtanh.pop %v265
    %v325 = vmul.f32 %v308, 0.0
    %v326 = vmul.f32 %v293, %v324
    %v327 = vadd.f32 %v325, %v326
    %v328 = vtanh.pop %v327
    %v329 = vmul.f32 %v323, %v328
    %330 = vset.pattern.permute.xlu0 1
    %331 = vperm.xlu0 %330, %v85
    %v332 = vpop.permute.xlu0 %331
    %v334 = vmul.f32 %v332, %v158
    %v335 = vmul.f32 %v332, %v159
    %v336 = vmul.f32 %v332, %v160
    %v337 = vmul.f32 %v332, %v161
    %v338 = vadd.f32 %v334, %v171
    %v339 = vadd.f32 %v335, %v172
    %v340 = vadd.f32 %v336, %v173
    %v341 = vadd.f32 %v337, %v174
    %342 = vmatpush.msra.mxu0 %v148
    %343 = vmatpush.msra.mxu0 %v144
    %344 = vmatpush.msra.mxu0 %v140
    %345 = vmatpush.msra.mxu0 %v136
    %346 = vmatpush.msra.mxu0 %v132
    %347 = vmatpush.msra.mxu0 %v128
    %348 = vmatpush.msra.mxu0 %v124
    %349 = vmatpush.msra.mxu0 %v120
    %350 = vmatpush.msra.mxu0 %v116
    %351 = vmatpush.msra.mxu0 %v112
    %352 = vmatpush.msra.mxu0 %v108
    %353 = vmatpush.msra.mxu0 %v104
    %354 = vmatpush.msra.mxu0 %v100
    %355 = vmatpush.msra.mxu0 %v96
    %356 = vmatpush.msra.mxu0 %v92
    %357 = vmatpush.msra.mxu0 %v88
    %358 = vmatmul.f32.gmra.mxu0 %v329
    %v359 = vpop.f32.mrf.mxu0
    %v360 = vadd.f32 0.0, %v359
    %361 = vdwg.mxu0
    %362 = vmatpush.msra.mxu0 %v149
    %363 = vmatpush.msra.mxu0 %v145
    %364 = vmatpush.msra.mxu0 %v141
    %365 = vmatpush.msra.mxu0 %v137
    %366 = vmatpush.msra.mxu0 %v133
    %367 = vmatpush.msra.mxu0 %v129
    %368 = vmatpush.msra.mxu0 %v125
    %369 = vmatpush.msra.mxu0 %v121
    %370 = vmatpush.msra.mxu0 %v117
    %371 = vmatpush.msra.mxu0 %v113
    %372 = vmatpush.msra.mxu0 %v109
    %373 = vmatpush.msra.mxu0 %v105
    %374 = vmatpush.msra.mxu0 %v101
    %375 = vmatpush.msra.mxu0 %v97
    %376 = vmatpush.msra.mxu0 %v93
    %377 = vmatpush.msra.mxu0 %v89
    %378 = vmatmul.f32.gmra.mxu0 %v329
    %v379 = vpop.f32.mrf.mxu0
    %v380 = vadd.f32 0.0, %v379
    %381 = vdwg.mxu0
    %382 = vmatpush.msra.mxu0 %v150
    %383 = vmatpush.msra.mxu0 %v146
    %384 = vmatpush.msra.mxu0 %v142
    %385 = vmatpush.msra.mxu0 %v138
    %386 = vmatpush.msra.mxu0 %v134
    %387 = vmatpush.msra.mxu0 %v130
    %388 = vmatpush.msra.mxu0 %v126
    %389 = vmatpush.msra.mxu0 %v122
    %390 = vmatpush.msra.mxu0 %v118
    %391 = vmatpush.msra.mxu0 %v114
    %392 = vmatpush.msra.mxu0 %v110
    %393 = vmatpush.msra.mxu0 %v106
    %394 = vmatpush.msra.mxu0 %v102
    %395 = vmatpush.msra.mxu0 %v98
    %396 = vmatpush.msra.mxu0 %v94
    %397 = vmatpush.msra.mxu0 %v90
    %398 = vmatmul.f32.gmra.mxu0 %v329
    %v399 = vpop.f32.mrf.mxu0
    %v400 = vadd.f32 0.0, %v399
    %401 = vdwg.mxu0
    %402 = vmatpush.msra.mxu0 %v151
    %403 = vmatpush.msra.mxu0 %v147
    %404 = vmatpush.msra.mxu0 %v143
    %405 = vmatpush.msra.mxu0 %v139
    %406 = vmatpush.msra.mxu0 %v135
    %407 = vmatpush.msra.mxu0 %v131
    %408 = vmatpush.msra.mxu0 %v127
    %409 = vmatpush.msra.mxu0 %v123
    %410 = vmatpush.msra.mxu0 %v119
    %411 = vmatpush.msra.mxu0 %v115
    %412 = vmatpush.msra.mxu0 %v111
    %413 = vmatpush.msra.mxu0 %v107
    %414 = vmatpush.msra.mxu0 %v103
    %415 = vmatpush.msra.mxu0 %v99
    %416 = vmatpush.msra.mxu0 %v95
    %417 = vmatpush.msra.mxu0 %v91
    %418 = vmatmul.f32.gmra.mxu0 %v329
    %v419 = vpop.f32.mrf.mxu0
    %v420 = vadd.f32 0.0, %v419
    %421 = vdwg.mxu0
    %v422 = vadd.f32 %v338, %v360
    %v423 = vadd.f32 %v339, %v380
    %v424 = vadd.f32 %v340, %v400
    %v425 = vadd.f32 %v341, %v420
    %v426 = vxor.u32 %v422, 2147483648
    %v427 = vxor.u32 %v423, 2147483648
    %v428 = vxor.u32 %v425, 2147483648
    %v429 = vmul.f32 %v426, 1.442695
    %v430 = vpow.pop %v429
    %v431 = vmul.f32 %v427, 1.442695
    %v432 = vpow.pop %v431
    %v433 = vmul.f32 %v428, 1.442695
    %v434 = vpow.pop %v433
    %v435 = vadd.f32 %v430, 1.0
    %v436 = vadd.f32 %v432, 1.0
    %v437 = vadd.f32 %v434, 1.0
    %v438 = vrcp.pop %v435
    %v439 = vmul.f32 %v435, %v438
    %v440 = vsub.f32 1.0, %v439
    %v441 = vmul.f32 %v438, %v440
    %v442 = vadd.f32 %v438, %v441
    %vm443 = vweird.f32 %v435
    %vm444 = vweird.f32 %v438
    %vm445 = vmor %vm443, %vm444
    %v446 = vsel %vm445, %v438, %v442
    %v447 = vand.u32 2147483647, %v435
    %vm448 = vcmp.eq.f32.partialorder %v447, 8.507059e+37
    %v449 = vand.u32 %v435, 2147483648
    %v450 = vor.u32 1.1754944e-38, %v449
    %v451 = vsel %vm448, %v450, %v446
    %v452 = vmul.f32 1.0, %v451
    %v453 = vrcp.pop %v436
    %v454 = vmul.f32 %v436, %v453
    %v455 = vsub.f32 1.0, %v454
    %v456 = vmul.f32 %v453, %v455
    %v457 = vadd.f32 %v453, %v456
    %vm458 = vweird.f32 %v436
    %vm459 = vweird.f32 %v453
    %vm460 = vmor %vm458, %vm459
    %v461 = vsel %vm460, %v453, %v457
    %v462 = vand.u32 2147483647, %v436
    %vm463 = vcmp.eq.f32.partialorder %v462, 8.507059e+37
    %v464 = vand.u32 %v436, 2147483648
    %v465 = vor.u32 1.1754944e-38, %v464
    %v466 = vsel %vm463, %v465, %v461
    %v467 = vmul.f32 1.0, %v466
    %v468 = vrcp.pop %v437
    %v469 = vmul.f32 %v437, %v468
    %v470 = vsub.f32 1.0, %v469
    %v471 = vmul.f32 %v468, %v470
    %v472 = vadd.f32 %v468, %v471
    %vm473 = vweird.f32 %v437
    %vm474 = vweird.f32 %v468
    %vm475 = vmor %vm473, %vm474
    %v476 = vsel %vm475, %v468, %v472
    %v477 = vand.u32 2147483647, %v437
    %vm478 = vcmp.eq.f32.partialorder %v477, 8.507059e+37
    %v479 = vand.u32 %v437, 2147483648
    %v480 = vor.u32 1.1754944e-38, %v479
    %v481 = vsel %vm478, %v480, %v476
    %v482 = vmul.f32 1.0, %v481
    %v483 = vtanh.pop %v424
    %v484 = vmul.f32 %v467, %v327
    %v485 = vmul.f32 %v452, %v483
    %v486 = vadd.f32 %v484, %v485
    %v487 = vtanh.pop %v486
    %v488 = vmul.f32 %v482, %v487
    %489 = vset.pattern.permute.xlu0 2
    %490 = vperm.xlu0 %489, %v85
    %v491 = vpop.permute.xlu0 %490
    %v493 = vmul.f32 %v491, %v158
    %v494 = vmul.f32 %v491, %v159
    %v495 = vmul.f32 %v491, %v160
    %v496 = vmul.f32 %v491, %v161
    %v497 = vadd.f32 %v493, %v171
    %v498 = vadd.f32 %v494, %v172
    %v499 = vadd.f32 %v495, %v173
    %v500 = vadd.f32 %v496, %v174
    %501 = vmatpush.msra.mxu0 %v148
    %502 = vmatpush.msra.mxu0 %v144
    %503 = vmatpush.msra.mxu0 %v140
    %504 = vmatpush.msra.mxu0 %v136
    %505 = vmatpush.msra.mxu0 %v132
    %506 = vmatpush.msra.mxu0 %v128
    %507 = vmatpush.msra.mxu0 %v124
    %508 = vmatpush.msra.mxu0 %v120
    %509 = vmatpush.msra.mxu0 %v116
    %510 = vmatpush.msra.mxu0 %v112
    %511 = vmatpush.msra.mxu0 %v108
    %512 = vmatpush.msra.mxu0 %v104
    %513 = vmatpush.msra.mxu0 %v100
    %514 = vmatpush.msra.mxu0 %v96
    %515 = vmatpush.msra.mxu0 %v92
    %516 = vmatpush.msra.mxu0 %v88
    %517 = vmatmul.f32.gmra.mxu0 %v488
    %v518 = vpop.f32.mrf.mxu0
    %v519 = vadd.f32 0.0, %v518
    %520 = vdwg.mxu0
    %521 = vmatpush.msra.mxu0 %v149
    %522 = vmatpush.msra.mxu0 %v145
    %523 = vmatpush.msra.mxu0 %v141
    %524 = vmatpush.msra.mxu0 %v137
    %525 = vmatpush.msra.mxu0 %v133
    %526 = vmatpush.msra.mxu0 %v129
    %527 = vmatpush.msra.mxu0 %v125
    %528 = vmatpush.msra.mxu0 %v121
    %529 = vmatpush.msra.mxu0 %v117
    %530 = vmatpush.msra.mxu0 %v113
    %531 = vmatpush.msra.mxu0 %v109
    %532 = vmatpush.msra.mxu0 %v105
    %533 = vmatpush.msra.mxu0 %v101
    %534 = vmatpush.msra.mxu0 %v97
    %535 = vmatpush.msra.mxu0 %v93
    %536 = vmatpush.msra.mxu0 %v89
    %537 = vmatmul.f32.gmra.mxu0 %v488
    %v538 = vpop.f32.mrf.mxu0
    %v539 = vadd.f32 0.0, %v538
    %540 = vdwg.mxu0
    %541 = vmatpush.msra.mxu0 %v150
    %542 = vmatpush.msra.mxu0 %v146
    %543 = vmatpush.msra.mxu0 %v142
    %544 = vmatpush.msra.mxu0 %v138
    %545 = vmatpush.msra.mxu0 %v134
    %546 = vmatpush.msra.mxu0 %v130
    %547 = vmatpush.msra.mxu0 %v126
    %548 = vmatpush.msra.mxu0 %v122
    %549 = vmatpush.msra.mxu0 %v118
    %550 = vmatpush.msra.mxu0 %v114
    %551 = vmatpush.msra.mxu0 %v110
    %552 = vmatpush.msra.mxu0 %v106
    %553 = vmatpush.msra.mxu0 %v102
    %554 = vmatpush.msra.mxu0 %v98
    %555 = vmatpush.msra.mxu0 %v94
    %556 = vmatpush.msra.mxu0 %v90
    %557 = vmatmul.f32.gmra.mxu0 %v488
    %v558 = vpop.f32.mrf.mxu0
    %v559 = vadd.f32 0.0, %v558
    %560 = vdwg.mxu0
    %561 = vmatpush.msra.mxu0 %v151
    %562 = vmatpush.msra.mxu0 %v147
    %563 = vmatpush.msra.mxu0 %v143
    %564 = vmatpush.msra.mxu0 %v139
    %565 = vmatpush.msra.mxu0 %v135
    %566 = vmatpush.msra.mxu0 %v131
    %567 = vmatpush.msra.mxu0 %v127
    %568 = vmatpush.msra.mxu0 %v123
    %569 = vmatpush.msra.mxu0 %v119
    %570 = vmatpush.msra.mxu0 %v115
    %571 = vmatpush.msra.mxu0 %v111
    %572 = vmatpush.msra.mxu0 %v107
    %573 = vmatpush.msra.mxu0 %v103
    %574 = vmatpush.msra.mxu0 %v99
    %575 = vmatpush.msra.mxu0 %v95
    %576 = vmatpush.msra.mxu0 %v91
    %577 = vmatmul.f32.gmra.mxu0 %v488
    %v578 = vpop.f32.mrf.mxu0
    %v579 = vadd.f32 0.0, %v578
    %580 = vdwg.mxu0
    %v581 = vadd.f32 %v497, %v519
    %v582 = vadd.f32 %v498, %v539
    %v583 = vadd.f32 %v499, %v559
    %v584 = vadd.f32 %v500, %v579
    %v585 = vxor.u32 %v581, 2147483648
    %v586 = vxor.u32 %v582, 2147483648
    %v587 = vxor.u32 %v584, 2147483648
    %v588 = vmul.f32 %v585, 1.442695
    %v589 = vpow.pop %v588
    %v590 = vmul.f32 %v586, 1.442695
    %v591 = vpow.pop %v590
    %v592 = vmul.f32 %v587, 1.442695
    %v593 = vpow.pop %v592
    %v594 = vadd.f32 %v589, 1.0
    %v595 = vadd.f32 %v591, 1.0
    %v596 = vadd.f32 %v593, 1.0
    %v597 = vrcp.pop %v594
    %v598 = vmul.f32 %v594, %v597
    %v599 = vsub.f32 1.0, %v598
    %v600 = vmul.f32 %v597, %v599
    %v601 = vadd.f32 %v597, %v600
    %vm602 = vweird.f32 %v594
    %vm603 = vweird.f32 %v597
    %vm604 = vmor %vm602, %vm603
    %v605 = vsel %vm604, %v597, %v601
    %v606 = vand.u32 2147483647, %v594
    %vm607 = vcmp.eq.f32.partialorder %v606, 8.507059e+37
    %v608 = vand.u32 %v594, 2147483648
    %v609 = vor.u32 1.1754944e-38, %v608
    %v610 = vsel %vm607, %v609, %v605
    %v611 = vmul.f32 1.0, %v610
    %v612 = vrcp.pop %v595
    %v613 = vmul.f32 %v595, %v612
    %v614 = vsub.f32 1.0, %v613
    %v615 = vmul.f32 %v612, %v614
    %v616 = vadd.f32 %v612, %v615
    %vm617 = vweird.f32 %v595
    %vm618 = vweird.f32 %v612
    %vm619 = vmor %vm617, %vm618
    %v620 = vsel %vm619, %v612, %v616
    %v621 = vand.u32 2147483647, %v595
    %vm622 = vcmp.eq.f32.partialorder %v621, 8.507059e+37
    %v623 = vand.u32 %v595, 2147483648
    %v624 = vor.u32 1.1754944e-38, %v623
    %v625 = vsel %vm622, %v624, %v620
    %v626 = vmul.f32 1.0, %v625
    %v627 = vrcp.pop %v596
    %v628 = vmul.f32 %v596, %v627
    %v629 = vsub.f32 1.0, %v628
    %v630 = vmul.f32 %v627, %v629
    %v631 = vadd.f32 %v627, %v630
    %vm632 = vweird.f32 %v596
    %vm633 = vweird.f32 %v627
    %vm634 = vmor %vm632, %vm633
    %v635 = vsel %vm634, %v627, %v631
    %v636 = vand.u32 2147483647, %v596
    %vm637 = vcmp.eq.f32.partialorder %v636, 8.507059e+37
    %v638 = vand.u32 %v596, 2147483648
    %v639 = vor.u32 1.1754944e-38, %v638
    %v640 = vsel %vm637, %v639, %v635
    %v641 = vmul.f32 1.0, %v640
    %v642 = vtanh.pop %v583
    %v643 = vmul.f32 %v626, %v486
    %v644 = vmul.f32 %v611, %v642
    %v645 = vadd.f32 %v643, %v644
    %v646 = vtanh.pop %v645
    %v647 = vmul.f32 %v641, %v646
    %648 = vset.pattern.permute.xlu0 3
    %649 = vperm.xlu0 %648, %v85
    %v650 = vpop.permute.xlu0 %649
    %v652 = vmul.f32 %v650, %v158
    %v653 = vmul.f32 %v650, %v159
    %v654 = vmul.f32 %v650, %v160
    %v655 = vmul.f32 %v650, %v161
    %v656 = vadd.f32 %v652, %v171
    %v657 = vadd.f32 %v653, %v172
    %v658 = vadd.f32 %v654, %v173
    %v659 = vadd.f32 %v655, %v174
    %660 = vmatpush.msra.mxu0 %v148
    %661 = vmatpush.msra.mxu0 %v144
    %662 = vmatpush.msra.mxu0 %v140
    %663 = vmatpush.msra.mxu0 %v136
    %664 = vmatpush.msra.mxu0 %v132
    %665 = vmatpush.msra.mxu0 %v128
    %666 = vmatpush.msra.mxu0 %v124
    %667 = vmatpush.msra.mxu0 %v120
    %668 = vmatpush.msra.mxu0 %v116
    %669 = vmatpush.msra.mxu0 %v112
    %670 = vmatpush.msra.mxu0 %v108
    %671 = vmatpush.msra.mxu0 %v104
    %672 = vmatpush.msra.mxu0 %v100
    %673 = vmatpush.msra.mxu0 %v96
    %674 = vmatpush.msra.mxu0 %v92
    %675 = vmatpush.msra.mxu0 %v88
    %676 = vmatmul.f32.gmra.mxu0 %v647
    %v677 = vpop.f32.mrf.mxu0
    %v678 = vadd.f32 0.0, %v677
    %679 = vdwg.mxu0
    %680 = vmatpush.msra.mxu0 %v149
    %681 = vmatpush.msra.mxu0 %v145
    %682 = vmatpush.msra.mxu0 %v141
    %683 = vmatpush.msra.mxu0 %v137
    %684 = vmatpush.msra.mxu0 %v133
    %685 = vmatpush.msra.mxu0 %v129
    %686 = vmatpush.msra.mxu0 %v125
    %687 = vmatpush.msra.mxu0 %v121
    %688 = vmatpush.msra.mxu0 %v117
    %689 = vmatpush.msra.mxu0 %v113
    %690 = vmatpush.msra.mxu0 %v109
    %691 = vmatpush.msra.mxu0 %v105
    %692 = vmatpush.msra.mxu0 %v101
    %693 = vmatpush.msra.mxu0 %v97
    %694 = vmatpush.msra.mxu0 %v93
    %695 = vmatpush.msra.mxu0 %v89
    %696 = vmatmul.f32.gmra.mxu0 %v647
    %v697 = vpop.f32.mrf.mxu0
    %v698 = vadd.f32 0.0, %v697
    %699 = vdwg.mxu0
    %700 = vmatpush.msra.mxu0 %v150
    %701 = vmatpush.msra.mxu0 %v146
    %702 = vmatpush.msra.mxu0 %v142
    %703 = vmatpush.msra.mxu0 %v138
    %704 = vmatpush.msra.mxu0 %v134
    %705 = vmatpush.msra.mxu0 %v130
    %706 = vmatpush.msra.mxu0 %v126
    %707 = vmatpush.msra.mxu0 %v122
    %708 = vmatpush.msra.mxu0 %v118
    %709 = vmatpush.msra.mxu0 %v114
    %710 = vmatpush.msra.mxu0 %v110
    %711 = vmatpush.msra.mxu0 %v106
    %712 = vmatpush.msra.mxu0 %v102
    %713 = vmatpush.msra.mxu0 %v98
    %714 = vmatpush.msra.mxu0 %v94
    %715 = vmatpush.msra.mxu0 %v90
    %716 = vmatmul.f32.gmra.mxu0 %v647
    %v717 = vpop.f32.mrf.mxu0
    %v718 = vadd.f32 0.0, %v717
    %719 = vdwg.mxu0
    %720 = vmatpush.msra.mxu0 %v151
    %721 = vmatpush.msra.mxu0 %v147
    %722 = vmatpush.msra.mxu0 %v143
    %723 = vmatpush.msra.mxu0 %v139
    %724 = vmatpush.msra.mxu0 %v135
    %725 = vmatpush.msra.mxu0 %v131
    %726 = vmatpush.msra.mxu0 %v127
    %727 = vmatpush.msra.mxu0 %v123
    %728 = vmatpush.msra.mxu0 %v119
    %729 = vmatpush.msra.mxu0 %v115
    %730 = vmatpush.msra.mxu0 %v111
    %731 = vmatpush.msra.mxu0 %v107
    %732 = vmatpush.msra.mxu0 %v103
    %733 = vmatpush.msra.mxu0 %v99
    %734 = vmatpush.msra.mxu0 %v95
    %735 = vmatpush.msra.mxu0 %v91
    %736 = vmatmul.f32.gmra.mxu0 %v647
    %v737 = vpop.f32.mrf.mxu0
    %v738 = vadd.f32 0.0, %v737
    %739 = vdwg.mxu0
    %v740 = vadd.f32 %v656, %v678
    %v741 = vadd.f32 %v657, %v698
    %v742 = vadd.f32 %v658, %v718
    %v743 = vadd.f32 %v659, %v738
    %v744 = vxor.u32 %v740, 2147483648
    %v745 = vxor.u32 %v741, 2147483648
    %v746 = vxor.u32 %v743, 2147483648
    %v747 = vmul.f32 %v744, 1.442695
    %v748 = vpow.pop %v747
    %v749 = vmul.f32 %v745, 1.442695
    %v750 = vpow.pop %v749
    %v751 = vmul.f32 %v746, 1.442695
    %v752 = vpow.pop %v751
    %v753 = vadd.f32 %v748, 1.0
    %v754 = vadd.f32 %v750, 1.0
    %v755 = vadd.f32 %v752, 1.0
    %v756 = vrcp.pop %v753
    %v757 = vmul.f32 %v753, %v756
    %v758 = vsub.f32 1.0, %v757
    %v759 = vmul.f32 %v756, %v758
    %v760 = vadd.f32 %v756, %v759
    %vm761 = vweird.f32 %v753
    %vm762 = vweird.f32 %v756
    %vm763 = vmor %vm761, %vm762
    %v764 = vsel %vm763, %v756, %v760
    %v765 = vand.u32 2147483647, %v753
    %vm766 = vcmp.eq.f32.partialorder %v765, 8.507059e+37
    %v767 = vand.u32 %v753, 2147483648
    %v768 = vor.u32 1.1754944e-38, %v767
    %v769 = vsel %vm766, %v768, %v764
    %v770 = vmul.f32 1.0, %v769
    %v771 = vrcp.pop %v754
    %v772 = vmul.f32 %v754, %v771
    %v773 = vsub.f32 1.0, %v772
    %v774 = vmul.f32 %v771, %v773
    %v775 = vadd.f32 %v771, %v774
    %vm776 = vweird.f32 %v754
    %vm777 = vweird.f32 %v771
    %vm778 = vmor %vm776, %vm777
    %v779 = vsel %vm778, %v771, %v775
    %v780 = vand.u32 2147483647, %v754
    %vm781 = vcmp.eq.f32.partialorder %v780, 8.507059e+37
    %v782 = vand.u32 %v754, 2147483648
    %v783 = vor.u32 1.1754944e-38, %v782
    %v784 = vsel %vm781, %v783, %v779
    %v785 = vmul.f32 1.0, %v784
    %v786 = vrcp.pop %v755
    %v787 = vmul.f32 %v755, %v786
    %v788 = vsub.f32 1.0, %v787
    %v789 = vmul.f32 %v786, %v788
    %v790 = vadd.f32 %v786, %v789
    %vm791 = vweird.f32 %v755
    %vm792 = vweird.f32 %v786
    %vm793 = vmor %vm791, %vm792
    %v794 = vsel %vm793, %v786, %v790
    %v795 = vand.u32 2147483647, %v755
    %vm796 = vcmp.eq.f32.partialorder %v795, 8.507059e+37
    %v797 = vand.u32 %v755, 2147483648
    %v798 = vor.u32 1.1754944e-38, %v797
    %v799 = vsel %vm796, %v798, %v794
    %v800 = vmul.f32 1.0, %v799
    %v801 = vtanh.pop %v742
    %v802 = vmul.f32 %v785, %v645
    %v803 = vmul.f32 %v770, %v801
    %v804 = vadd.f32 %v802, %v803
    %v805 = vtanh.pop %v804
    %v806 = vmul.f32 %v800, %v805
    %807 = vset.pattern.permute.xlu0 4
    %808 = vperm.xlu0 %807, %v85
    %v809 = vpop.permute.xlu0 %808
    %v811 = vmul.f32 %v809, %v158
    %v812 = vmul.f32 %v809, %v159
    %v813 = vmul.f32 %v809, %v160
    %v814 = vmul.f32 %v809, %v161
    %v815 = vadd.f32 %v811, %v171
    %v816 = vadd.f32 %v812, %v172
    %v817 = vadd.f32 %v813, %v173
    %v818 = vadd.f32 %v814, %v174
    %819 = vmatpush.msra.mxu0 %v148
    %820 = vmatpush.msra.mxu0 %v144
    %821 = vmatpush.msra.mxu0 %v140
    %822 = vmatpush.msra.mxu0 %v136
    %823 = vmatpush.msra.mxu0 %v132
    %824 = vmatpush.msra.mxu0 %v128
    %825 = vmatpush.msra.mxu0 %v124
    %826 = vmatpush.msra.mxu0 %v120
    %827 = vmatpush.msra.mxu0 %v116
    %828 = vmatpush.msra.mxu0 %v112
    %829 = vmatpush.msra.mxu0 %v108
    %830 = vmatpush.msra.mxu0 %v104
    %831 = vmatpush.msra.mxu0 %v100
    %832 = vmatpush.msra.mxu0 %v96
    %833 = vmatpush.msra.mxu0 %v92
    %834 = vmatpush.msra.mxu0 %v88
    %835 = vmatmul.f32.gmra.mxu0 %v806
    %v836 = vpop.f32.mrf.mxu0
    %v837 = vadd.f32 0.0, %v836
    %838 = vdwg.mxu0
    %839 = vmatpush.msra.mxu0 %v149
    %840 = vmatpush.msra.mxu0 %v145
    %841 = vmatpush.msra.mxu0 %v141
    %842 = vmatpush.msra.mxu0 %v137
    %843 = vmatpush.msra.mxu0 %v133
    %844 = vmatpush.msra.mxu0 %v129
    %845 = vmatpush.msra.mxu0 %v125
    %846 = vmatpush.msra.mxu0 %v121
    %847 = vmatpush.msra.mxu0 %v117
    %848 = vmatpush.msra.mxu0 %v113
    %849 = vmatpush.msra.mxu0 %v109
    %850 = vmatpush.msra.mxu0 %v105
    %851 = vmatpush.msra.mxu0 %v101
    %852 = vmatpush.msra.mxu0 %v97
    %853 = vmatpush.msra.mxu0 %v93
    %854 = vmatpush.msra.mxu0 %v89
    %855 = vmatmul.f32.gmra.mxu0 %v806
    %v856 = vpop.f32.mrf.mxu0
    %v857 = vadd.f32 0.0, %v856
    %858 = vdwg.mxu0
    %859 = vmatpush.msra.mxu0 %v150
    %860 = vmatpush.msra.mxu0 %v146
    %861 = vmatpush.msra.mxu0 %v142
    %862 = vmatpush.msra.mxu0 %v138
    %863 = vmatpush.msra.mxu0 %v134
    %864 = vmatpush.msra.mxu0 %v130
    %865 = vmatpush.msra.mxu0 %v126
    %866 = vmatpush.msra.mxu0 %v122
    %867 = vmatpush.msra.mxu0 %v118
    %868 = vmatpush.msra.mxu0 %v114
    %869 = vmatpush.msra.mxu0 %v110
    %870 = vmatpush.msra.mxu0 %v106
    %871 = vmatpush.msra.mxu0 %v102
    %872 = vmatpush.msra.mxu0 %v98
    %873 = vmatpush.msra.mxu0 %v94
    %874 = vmatpush.msra.mxu0 %v90
    %875 = vmatmul.f32.gmra.mxu0 %v806
    %v876 = vpop.f32.mrf.mxu0
    %v877 = vadd.f32 0.0, %v876
    %878 = vdwg.mxu0
    %879 = vmatpush.msra.mxu0 %v151
    %880 = vmatpush.msra.mxu0 %v147
    %881 = vmatpush.msra.mxu0 %v143
    %882 = vmatpush.msra.mxu0 %v139
    %883 = vmatpush.msra.mxu0 %v135
    %884 = vmatpush.msra.mxu0 %v131
    %885 = vmatpush.msra.mxu0 %v127
    %886 = vmatpush.msra.mxu0 %v123
    %887 = vmatpush.msra.mxu0 %v119
    %888 = vmatpush.msra.mxu0 %v115
    %889 = vmatpush.msra.mxu0 %v111
    %890 = vmatpush.msra.mxu0 %v107
    %891 = vmatpush.msra.mxu0 %v103
    %892 = vmatpush.msra.mxu0 %v99
    %893 = vmatpush.msra.mxu0 %v95
    %894 = vmatpush.msra.mxu0 %v91
    %895 = vmatmul.f32.gmra.mxu0 %v806
    %v896 = vpop.f32.mrf.mxu0
    %v897 = vadd.f32 0.0, %v896
    %898 = vdwg.mxu0
    %v899 = vadd.f32 %v815, %v837
    %v900 = vadd.f32 %v816, %v857
    %v901 = vadd.f32 %v817, %v877
    %v902 = vadd.f32 %v818, %v897
    %v903 = vxor.u32 %v899, 2147483648
    %v904 = vxor.u32 %v900, 2147483648
    %v905 = vxor.u32 %v902, 2147483648
    %v906 = vmul.f32 %v903, 1.442695
    %v907 = vpow.pop %v906
    %v908 = vmul.f32 %v904, 1.442695
    %v909 = vpow.pop %v908
    %v910 = vmul.f32 %v905, 1.442695
    %v911 = vpow.pop %v910
    %v912 = vadd.f32 %v907, 1.0
    %v913 = vadd.f32 %v909, 1.0
    %v914 = vadd.f32 %v911, 1.0
    %v915 = vrcp.pop %v912
    %v916 = vmul.f32 %v912, %v915
    %v917 = vsub.f32 1.0, %v916
    %v918 = vmul.f32 %v915, %v917
    %v919 = vadd.f32 %v915, %v918
    %vm920 = vweird.f32 %v912
    %vm921 = vweird.f32 %v915
    %vm922 = vmor %vm920, %vm921
    %v923 = vsel %vm922, %v915, %v919
    %v924 = vand.u32 2147483647, %v912
    %vm925 = vcmp.eq.f32.partialorder %v924, 8.507059e+37
    %v926 = vand.u32 %v912, 2147483648
    %v927 = vor.u32 1.1754944e-38, %v926
    %v928 = vsel %vm925, %v927, %v923
    %v929 = vmul.f32 1.0, %v928
    %v930 = vrcp.pop %v913
    %v931 = vmul.f32 %v913, %v930
    %v932 = vsub.f32 1.0, %v931
    %v933 = vmul.f32 %v930, %v932
    %v934 = vadd.f32 %v930, %v933
    %vm935 = vweird.f32 %v913
    %vm936 = vweird.f32 %v930
    %vm937 = vmor %vm935, %vm936
    %v938 = vsel %vm937, %v930, %v934
    %v939 = vand.u32 2147483647, %v913
    %vm940 = vcmp.eq.f32.partialorder %v939, 8.507059e+37
    %v941 = vand.u32 %v913, 2147483648
    %v942 = vor.u32 1.1754944e-38, %v941
    %v943 = vsel %vm940, %v942, %v938
    %v944 = vmul.f32 1.0, %v943
    %v945 = vrcp.pop %v914
    %v946 = vmul.f32 %v914, %v945
    %v947 = vsub.f32 1.0, %v946
    %v948 = vmul.f32 %v945, %v947
    %v949 = vadd.f32 %v945, %v948
    %vm950 = vweird.f32 %v914
    %vm951 = vweird.f32 %v945
    %vm952 = vmor %vm950, %vm951
    %v953 = vsel %vm952, %v945, %v949
    %v954 = vand.u32 2147483647, %v914
    %vm955 = vcmp.eq.f32.partialorder %v954, 8.507059e+37
    %v956 = vand.u32 %v914, 2147483648
    %v957 = vor.u32 1.1754944e-38, %v956
    %v958 = vsel %vm955, %v957, %v953
    %v959 = vmul.f32 1.0, %v958
    %v960 = vtanh.pop %v901
    %v961 = vmul.f32 %v944, %v804
    %v962 = vmul.f32 %v929, %v960
    %v963 = vadd.f32 %v961, %v962
    %v964 = vtanh.pop %v963
    %v965 = vmul.f32 %v959, %v964
    %966 = vset.pattern.permute.xlu0 5
    %967 = vperm.xlu0 %966, %v85
    %v968 = vpop.permute.xlu0 %967
    %v970 = vmul.f32 %v968, %v158
    %v971 = vmul.f32 %v968, %v159
    %v972 = vmul.f32 %v968, %v160
    %v973 = vmul.f32 %v968, %v161
    %v974 = vadd.f32 %v970, %v171
    %v975 = vadd.f32 %v971, %v172
    %v976 = vadd.f32 %v972, %v173
    %v977 = vadd.f32 %v973, %v174
    %978 = vmatpush.msra.mxu0 %v148
    %979 = vmatpush.msra.mxu0 %v144
    %980 = vmatpush.msra.mxu0 %v140
    %981 = vmatpush.msra.mxu0 %v136
    %982 = vmatpush.msra.mxu0 %v132
    %983 = vmatpush.msra.mxu0 %v128
    %984 = vmatpush.msra.mxu0 %v124
    %985 = vmatpush.msra.mxu0 %v120
    %986 = vmatpush.msra.mxu0 %v116
    %987 = vmatpush.msra.mxu0 %v112
    %988 = vmatpush.msra.mxu0 %v108
    %989 = vmatpush.msra.mxu0 %v104
    %990 = vmatpush.msra.mxu0 %v100
    %991 = vmatpush.msra.mxu0 %v96
    %992 = vmatpush.msra.mxu0 %v92
    %993 = vmatpush.msra.mxu0 %v88
    %994 = vmatmul.f32.gmra.mxu0 %v965
    %v995 = vpop.f32.mrf.mxu0
    %v996 = vadd.f32 0.0, %v995
    %997 = vdwg.mxu0
    %998 = vmatpush.msra.mxu0 %v149
    %999 = vmatpush.msra.mxu0 %v145
    %1000 = vmatpush.msra.mxu0 %v141
    %1001 = vmatpush.msra.mxu0 %v137
    %1002 = vmatpush.msra.mxu0 %v133
    %1003 = vmatpush.msra.mxu0 %v129
    %1004 = vmatpush.msra.mxu0 %v125
    %1005 = vmatpush.msra.mxu0 %v121
    %1006 = vmatpush.msra.mxu0 %v117
    %1007 = vmatpush.msra.mxu0 %v113
    %1008 = vmatpush.msra.mxu0 %v109
    %1009 = vmatpush.msra.mxu0 %v105
    %1010 = vmatpush.msra.mxu0 %v101
    %1011 = vmatpush.msra.mxu0 %v97
    %1012 = vmatpush.msra.mxu0 %v93
    %1013 = vmatpush.msra.mxu0 %v89
    %1014 = vmatmul.f32.gmra.mxu0 %v965
    %v1015 = vpop.f32.mrf.mxu0
    %v1016 = vadd.f32 0.0, %v1015
    %1017 = vdwg.mxu0
    %1018 = vmatpush.msra.mxu0 %v150
    %1019 = vmatpush.msra.mxu0 %v146
    %1020 = vmatpush.msra.mxu0 %v142
    %1021 = vmatpush.msra.mxu0 %v138
    %1022 = vmatpush.msra.mxu0 %v134
    %1023 = vmatpush.msra.mxu0 %v130
    %1024 = vmatpush.msra.mxu0 %v126
    %1025 = vmatpush.msra.mxu0 %v122
    %1026 = vmatpush.msra.mxu0 %v118
    %1027 = vmatpush.msra.mxu0 %v114
    %1028 = vmatpush.msra.mxu0 %v110
    %1029 = vmatpush.msra.mxu0 %v106
    %1030 = vmatpush.msra.mxu0 %v102
    %1031 = vmatpush.msra.mxu0 %v98
    %1032 = vmatpush.msra.mxu0 %v94
    %1033 = vmatpush.msra.mxu0 %v90
    %1034 = vmatmul.f32.gmra.mxu0 %v965
    %v1035 = vpop.f32.mrf.mxu0
    %v1036 = vadd.f32 0.0, %v1035
    %1037 = vdwg.mxu0
    %1038 = vmatpush.msra.mxu0 %v151
    %1039 = vmatpush.msra.mxu0 %v147
    %1040 = vmatpush.msra.mxu0 %v143
    %1041 = vmatpush.msra.mxu0 %v139
    %1042 = vmatpush.msra.mxu0 %v135
    %1043 = vmatpush.msra.mxu0 %v131
    %1044 = vmatpush.msra.mxu0 %v127
    %1045 = vmatpush.msra.mxu0 %v123
    %1046 = vmatpush.msra.mxu0 %v119
    %1047 = vmatpush.msra.mxu0 %v115
    %1048 = vmatpush.msra.mxu0 %v111
    %1049 = vmatpush.msra.mxu0 %v107
    %1050 = vmatpush.msra.mxu0 %v103
    %1051 = vmatpush.msra.mxu0 %v99
    %1052 = vmatpush.msra.mxu0 %v95
    %1053 = vmatpush.msra.mxu0 %v91
    %1054 = vmatmul.f32.gmra.mxu0 %v965
    %v1055 = vpop.f32.mrf.mxu0
    %v1056 = vadd.f32 0.0, %v1055
    %1057 = vdwg.mxu0
    %v1058 = vadd.f32 %v974, %v996
    %v1059 = vadd.f32 %v975, %v1016
    %v1060 = vadd.f32 %v976, %v1036
    %v1061 = vadd.f32 %v977, %v1056
    %v1062 = vxor.u32 %v1058, 2147483648
    %v1063 = vxor.u32 %v1059, 2147483648
    %v1064 = vxor.u32 %v1061, 2147483648
    %v1065 = vmul.f32 %v1062, 1.442695
    %v1066 = vpow.pop %v1065
    %v1067 = vmul.f32 %v1063, 1.442695
    %v1068 = vpow.pop %v1067
    %v1069 = vmul.f32 %v1064, 1.442695
    %v1070 = vpow.pop %v1069
    %v1071 = vadd.f32 %v1066, 1.0
    %v1072 = vadd.f32 %v1068, 1.0
    %v1073 = vadd.f32 %v1070, 1.0
    %v1074 = vrcp.pop %v1071
    %v1075 = vmul.f32 %v1071, %v1074
    %v1076 = vsub.f32 1.0, %v1075
    %v1077 = vmul.f32 %v1074, %v1076
    %v1078 = vadd.f32 %v1074, %v1077
    %vm1079 = vweird.f32 %v1071
    %vm1080 = vweird.f32 %v1074
    %vm1081 = vmor %vm1079, %vm1080
    %v1082 = vsel %vm1081, %v1074, %v1078
    %v1083 = vand.u32 2147483647, %v1071
    %vm1084 = vcmp.eq.f32.partialorder %v1083, 8.507059e+37
    %v1085 = vand.u32 %v1071, 2147483648
    %v1086 = vor.u32 1.1754944e-38, %v1085
    %v1087 = vsel %vm1084, %v1086, %v1082
    %v1088 = vmul.f32 1.0, %v1087
    %v1089 = vrcp.pop %v1072
    %v1090 = vmul.f32 %v1072, %v1089
    %v1091 = vsub.f32 1.0, %v1090
    %v1092 = vmul.f32 %v1089, %v1091
    %v1093 = vadd.f32 %v1089, %v1092
    %vm1094 = vweird.f32 %v1072
    %vm1095 = vweird.f32 %v1089
    %vm1096 = vmor %vm1094, %vm1095
    %v1097 = vsel %vm1096, %v1089, %v1093
    %v1098 = vand.u32 2147483647, %v1072
    %vm1099 = vcmp.eq.f32.partialorder %v1098, 8.507059e+37
    %v1100 = vand.u32 %v1072, 2147483648
    %v1101 = vor.u32 1.1754944e-38, %v1100
    %v1102 = vsel %vm1099, %v1101, %v1097
    %v1103 = vmul.f32 1.0, %v1102
    %v1104 = vrcp.pop %v1073
    %v1105 = vmul.f32 %v1073, %v1104
    %v1106 = vsub.f32 1.0, %v1105
    %v1107 = vmul.f32 %v1104, %v1106
    %v1108 = vadd.f32 %v1104, %v1107
    %vm1109 = vweird.f32 %v1073
    %vm1110 = vweird.f32 %v1104
    %vm1111 = vmor %vm1109, %vm1110
    %v1112 = vsel %vm1111, %v1104, %v1108
    %v1113 = vand.u32 2147483647, %v1073
    %vm1114 = vcmp.eq.f32.partialorder %v1113, 8.507059e+37
    %v1115 = vand.u32 %v1073, 2147483648
    %v1116 = vor.u32 1.1754944e-38, %v1115
    %v1117 = vsel %vm1114, %v1116, %v1112
    %v1118 = vmul.f32 1.0, %v1117
    %v1119 = vtanh.pop %v1060
    %v1120 = vmul.f32 %v1103, %v963
    %v1121 = vmul.f32 %v1088, %v1119
    %v1122 = vadd.f32 %v1120, %v1121
    %v1123 = vtanh.pop %v1122
    %v1124 = vmul.f32 %v1118, %v1123
    %1125 = vset.pattern.permute.xlu0 6
    %1126 = vperm.xlu0 %1125, %v85
    %v1127 = vpop.permute.xlu0 %1126
    %v1129 = vmul.f32 %v1127, %v158
    %v1130 = vmul.f32 %v1127, %v159
    %v1131 = vmul.f32 %v1127, %v160
    %v1132 = vmul.f32 %v1127, %v161
    %v1133 = vadd.f32 %v1129, %v171
    %v1134 = vadd.f32 %v1130, %v172
    %v1135 = vadd.f32 %v1131, %v173
    %v1136 = vadd.f32 %v1132, %v174
    %1137 = vmatpush.msra.mxu0 %v148
    %1138 = vmatpush.msra.mxu0 %v144
    %1139 = vmatpush.msra.mxu0 %v140
    %1140 = vmatpush.msra.mxu0 %v136
    %1141 = vmatpush.msra.mxu0 %v132
    %1142 = vmatpush.msra.mxu0 %v128
    %1143 = vmatpush.msra.mxu0 %v124
    %1144 = vmatpush.msra.mxu0 %v120
    %1145 = vmatpush.msra.mxu0 %v116
    %1146 = vmatpush.msra.mxu0 %v112
    %1147 = vmatpush.msra.mxu0 %v108
    %1148 = vmatpush.msra.mxu0 %v104
    %1149 = vmatpush.msra.mxu0 %v100
    %1150 = vmatpush.msra.mxu0 %v96
    %1151 = vmatpush.msra.mxu0 %v92
    %1152 = vmatpush.msra.mxu0 %v88
    %1153 = vmatmul.f32.gmra.mxu0 %v1124
    %v1154 = vpop.f32.mrf.mxu0
    %v1155 = vadd.f32 0.0, %v1154
    %1156 = vdwg.mxu0
    %1157 = vmatpush.msra.mxu0 %v149
    %1158 = vmatpush.msra.mxu0 %v145
    %1159 = vmatpush.msra.mxu0 %v141
    %1160 = vmatpush.msra.mxu0 %v137
    %1161 = vmatpush.msra.mxu0 %v133
    %1162 = vmatpush.msra.mxu0 %v129
    %1163 = vmatpush.msra.mxu0 %v125
    %1164 = vmatpush.msra.mxu0 %v121
    %1165 = vmatpush.msra.mxu0 %v117
    %1166 = vmatpush.msra.mxu0 %v113
    %1167 = vmatpush.msra.mxu0 %v109
    %1168 = vmatpush.msra.mxu0 %v105
    %1169 = vmatpush.msra.mxu0 %v101
    %1170 = vmatpush.msra.mxu0 %v97
    %1171 = vmatpush.msra.mxu0 %v93
    %1172 = vmatpush.msra.mxu0 %v89
    %1173 = vmatmul.f32.gmra.mxu0 %v1124
    %v1174 = vpop.f32.mrf.mxu0
    %v1175 = vadd.f32 0.0, %v1174
    %1176 = vdwg.mxu0
    %1177 = vmatpush.msra.mxu0 %v150
    %1178 = vmatpush.msra.mxu0 %v146
    %1179 = vmatpush.msra.mxu0 %v142
    %1180 = vmatpush.msra.mxu0 %v138
    %1181 = vmatpush.msra.mxu0 %v134
    %1182 = vmatpush.msra.mxu0 %v130
    %1183 = vmatpush.msra.mxu0 %v126
    %1184 = vmatpush.msra.mxu0 %v122
    %1185 = vmatpush.msra.mxu0 %v118
    %1186 = vmatpush.msra.mxu0 %v114
    %1187 = vmatpush.msra.mxu0 %v110
    %1188 = vmatpush.msra.mxu0 %v106
    %1189 = vmatpush.msra.mxu0 %v102
    %1190 = vmatpush.msra.mxu0 %v98
    %1191 = vmatpush.msra.mxu0 %v94
    %1192 = vmatpush.msra.mxu0 %v90
    %1193 = vmatmul.f32.gmra.mxu0 %v1124
    %v1194 = vpop.f32.mrf.mxu0
    %v1195 = vadd.f32 0.0, %v1194
    %1196 = vdwg.mxu0
    %1197 = vmatpush.msra.mxu0 %v151
    %1198 = vmatpush.msra.mxu0 %v147
    %1199 = vmatpush.msra.mxu0 %v143
    %1200 = vmatpush.msra.mxu0 %v139
    %1201 = vmatpush.msra.mxu0 %v135
    %1202 = vmatpush.msra.mxu0 %v131
    %1203 = vmatpush.msra.mxu0 %v127
    %1204 = vmatpush.msra.mxu0 %v123
    %1205 = vmatpush.msra.mxu0 %v119
    %1206 = vmatpush.msra.mxu0 %v115
    %1207 = vmatpush.msra.mxu0 %v111
    %1208 = vmatpush.msra.mxu0 %v107
    %1209 = vmatpush.msra.mxu0 %v103
    %1210 = vmatpush.msra.mxu0 %v99
    %1211 = vmatpush.msra.mxu0 %v95
    %1212 = vmatpush.msra.mxu0 %v91
    %1213 = vmatmul.f32.gmra.mxu0 %v1124
    %v1214 = vpop.f32.mrf.mxu0
    %v1215 = vadd.f32 0.0, %v1214
    %1216 = vdwg.mxu0
    %v1217 = vadd.f32 %v1133, %v1155
    %v1218 = vadd.f32 %v1134, %v1175
    %v1219 = vadd.f32 %v1135, %v1195
    %v1220 = vadd.f32 %v1136, %v1215
    %v1221 = vxor.u32 %v1217, 2147483648
    %v1222 = vxor.u32 %v1218, 2147483648
    %v1223 = vxor.u32 %v1220, 2147483648
    %v1224 = vmul.f32 %v1221, 1.442695
    %v1225 = vpow.pop %v1224
    %v1226 = vmul.f32 %v1222, 1.442695
    %v1227 = vpow.pop %v1226
    %v1228 = vmul.f32 %v1223, 1.442695
    %v1229 = vpow.pop %v1228
    %v1230 = vadd.f32 %v1225, 1.0
    %v1231 = vadd.f32 %v1227, 1.0
    %v1232 = vadd.f32 %v1229, 1.0
    %v1233 = vrcp.pop %v1230
    %v1234 = vmul.f32 %v1230, %v1233
    %v1235 = vsub.f32 1.0, %v1234
    %v1236 = vmul.f32 %v1233, %v1235
    %v1237 = vadd.f32 %v1233, %v1236
    %vm1238 = vweird.f32 %v1230
    %vm1239 = vweird.f32 %v1233
    %vm1240 = vmor %vm1238, %vm1239
    %v1241 = vsel %vm1240, %v1233, %v1237
    %v1242 = vand.u32 2147483647, %v1230
    %vm1243 = vcmp.eq.f32.partialorder %v1242, 8.507059e+37
    %v1244 = vand.u32 %v1230, 2147483648
    %v1245 = vor.u32 1.1754944e-38, %v1244
    %v1246 = vsel %vm1243, %v1245, %v1241
    %v1247 = vmul.f32 1.0, %v1246
    %v1248 = vrcp.pop %v1231
    %v1249 = vmul.f32 %v1231, %v1248
    %v1250 = vsub.f32 1.0, %v1249
    %v1251 = vmul.f32 %v1248, %v1250
    %v1252 = vadd.f32 %v1248, %v1251
    %vm1253 = vweird.f32 %v1231
    %vm1254 = vweird.f32 %v1248
    %vm1255 = vmor %vm1253, %vm1254
    %v1256 = vsel %vm1255, %v1248, %v1252
    %v1257 = vand.u32 2147483647, %v1231
    %vm1258 = vcmp.eq.f32.partialorder %v1257, 8.507059e+37
    %v1259 = vand.u32 %v1231, 2147483648
    %v1260 = vor.u32 1.1754944e-38, %v1259
    %v1261 = vsel %vm1258, %v1260, %v1256
    %v1262 = vmul.f32 1.0, %v1261
    %v1263 = vrcp.pop %v1232
    %v1264 = vmul.f32 %v1232, %v1263
    %v1265 = vsub.f32 1.0, %v1264
    %v1266 = vmul.f32 %v1263, %v1265
    %v1267 = vadd.f32 %v1263, %v1266
    %vm1268 = vweird.f32 %v1232
    %vm1269 = vweird.f32 %v1263
    %vm1270 = vmor %vm1268, %vm1269
    %v1271 = vsel %vm1270, %v1263, %v1267
    %v1272 = vand.u32 2147483647, %v1232
    %vm1273 = vcmp.eq.f32.partialorder %v1272, 8.507059e+37
    %v1274 = vand.u32 %v1232, 2147483648
    %v1275 = vor.u32 1.1754944e-38, %v1274
    %v1276 = vsel %vm1273, %v1275, %v1271
    %v1277 = vmul.f32 1.0, %v1276
    %v1278 = vtanh.pop %v1219
    %v1279 = vmul.f32 %v1262, %v1122
    %v1280 = vmul.f32 %v1247, %v1278
    %v1281 = vadd.f32 %v1279, %v1280
    %v1282 = vtanh.pop %v1281
    %v1283 = vmul.f32 %v1277, %v1282
    %1284 = vset.pattern.permute.xlu0 7
    %1285 = vperm.xlu0 %1284, %v85
    %v1286 = vpop.permute.xlu0 %1285
    %v1288 = vmul.f32 %v1286, %v158
    %v1289 = vmul.f32 %v1286, %v159
    %v1290 = vmul.f32 %v1286, %v160
    %v1291 = vmul.f32 %v1286, %v161
    %v1292 = vadd.f32 %v1288, %v171
    %v1293 = vadd.f32 %v1289, %v172
    %v1294 = vadd.f32 %v1290, %v173
    %v1295 = vadd.f32 %v1291, %v174
    %1296 = vmatpush.msra.mxu0 %v148
    %1297 = vmatpush.msra.mxu0 %v144
    %1298 = vmatpush.msra.mxu0 %v140
    %1299 = vmatpush.msra.mxu0 %v136
    %1300 = vmatpush.msra.mxu0 %v132
    %1301 = vmatpush.msra.mxu0 %v128
    %1302 = vmatpush.msra.mxu0 %v124
    %1303 = vmatpush.msra.mxu0 %v120
    %1304 = vmatpush.msra.mxu0 %v116
    %1305 = vmatpush.msra.mxu0 %v112
    %1306 = vmatpush.msra.mxu0 %v108
    %1307 = vmatpush.msra.mxu0 %v104
    %1308 = vmatpush.msra.mxu0 %v100
    %1309 = vmatpush.msra.mxu0 %v96
    %1310 = vmatpush.msra.mxu0 %v92
    %1311 = vmatpush.msra.mxu0 %v88
    %1312 = vmatmul.f32.gmra.mxu0 %v1283
    %v1313 = vpop.f32.mrf.mxu0
    %v1314 = vadd.f32 0.0, %v1313
    %1315 = vdwg.mxu0
    %1316 = vmatpush.msra.mxu0 %v149
    %1317 = vmatpush.msra.mxu0 %v145
    %1318 = vmatpush.msra.mxu0 %v141
    %1319 = vmatpush.msra.mxu0 %v137
    %1320 = vmatpush.msra.mxu0 %v133
    %1321 = vmatpush.msra.mxu0 %v129
    %1322 = vmatpush.msra.mxu0 %v125
    %1323 = vmatpush.msra.mxu0 %v121
    %1324 = vmatpush.msra.mxu0 %v117
    %1325 = vmatpush.msra.mxu0 %v113
    %1326 = vmatpush.msra.mxu0 %v109
    %1327 = vmatpush.msra.mxu0 %v105
    %1328 = vmatpush.msra.mxu0 %v101
    %1329 = vmatpush.msra.mxu0 %v97
    %1330 = vmatpush.msra.mxu0 %v93
    %1331 = vmatpush.msra.mxu0 %v89
    %1332 = vmatmul.f32.gmra.mxu0 %v1283
    %v1333 = vpop.f32.mrf.mxu0
    %v1334 = vadd.f32 0.0, %v1333
    %1335 = vdwg.mxu0
    %1336 = vmatpush.msra.mxu0 %v150
    %1337 = vmatpush.msra.mxu0 %v146
    %1338 = vmatpush.msra.mxu0 %v142
    %1339 = vmatpush.msra.mxu0 %v138
    %1340 = vmatpush.msra.mxu0 %v134
    %1341 = vmatpush.msra.mxu0 %v130
    %1342 = vmatpush.msra.mxu0 %v126
    %1343 = vmatpush.msra.mxu0 %v122
    %1344 = vmatpush.msra.mxu0 %v118
    %1345 = vmatpush.msra.mxu0 %v114
    %1346 = vmatpush.msra.mxu0 %v110
    %1347 = vmatpush.msra.mxu0 %v106
    %1348 = vmatpush.msra.mxu0 %v102
    %1349 = vmatpush.msra.mxu0 %v98
    %1350 = vmatpush.msra.mxu0 %v94
    %1351 = vmatpush.msra.mxu0 %v90
    %1352 = vmatmul.f32.gmra.mxu0 %v1283
    %v1353 = vpop.f32.mrf.mxu0
    %v1354 = vadd.f32 0.0, %v1353
    %1355 = vdwg.mxu0
    %1356 = vmatpush.msra.mxu0 %v151
    %1357 = vmatpush.msra.mxu0 %v147
    %1358 = vmatpush.msra.mxu0 %v143
    %1359 = vmatpush.msra.mxu0 %v139
    %1360 = vmatpush.msra.mxu0 %v135
    %1361 = vmatpush.msra.mxu0 %v131
    %1362 = vmatpush.msra.mxu0 %v127
    %1363 = vmatpush.msra.mxu0 %v123
    %1364 = vmatpush.msra.mxu0 %v119
    %1365 = vmatpush.msra.mxu0 %v115
    %1366 = vmatpush.msra.mxu0 %v111
    %1367 = vmatpush.msra.mxu0 %v107
    %1368 = vmatpush.msra.mxu0 %v103
    %1369 = vmatpush.msra.mxu0 %v99
    %1370 = vmatpush.msra.mxu0 %v95
    %1371 = vmatpush.msra.mxu0 %v91
    %1372 = vmatmul.f32.gmra.mxu0 %v1283
    %v1373 = vpop.f32.mrf.mxu0
    %v1374 = vadd.f32 0.0, %v1373
    %1375 = vdwg.mxu0
    %v1376 = vadd.f32 %v1292, %v1314
    %v1377 = vadd.f32 %v1293, %v1334
    %v1378 = vadd.f32 %v1294, %v1354
    %v1379 = vadd.f32 %v1295, %v1374
    %v1380 = vxor.u32 %v1376, 2147483648
    %v1381 = vxor.u32 %v1377, 2147483648
    %v1382 = vxor.u32 %v1379, 2147483648
    %v1383 = vmul.f32 %v1380, 1.442695
    %v1384 = vpow.pop %v1383
    %v1385 = vmul.f32 %v1381, 1.442695
    %v1386 = vpow.pop %v1385
    %v1387 = vmul.f32 %v1382, 1.442695
    %v1388 = vpow.pop %v1387
    %v1389 = vadd.f32 %v1384, 1.0
    %v1390 = vadd.f32 %v1386, 1.0
    %v1391 = vadd.f32 %v1388, 1.0
    %v1392 = vrcp.pop %v1389
    %v1393 = vmul.f32 %v1389, %v1392
    %v1394 = vsub.f32 1.0, %v1393
    %v1395 = vmul.f32 %v1392, %v1394
    %v1396 = vadd.f32 %v1392, %v1395
    %vm1397 = vweird.f32 %v1389
    %vm1398 = vweird.f32 %v1392
    %vm1399 = vmor %vm1397, %vm1398
    %v1400 = vsel %vm1399, %v1392, %v1396
    %v1401 = vand.u32 2147483647, %v1389
    %vm1402 = vcmp.eq.f32.partialorder %v1401, 8.507059e+37
    %v1403 = vand.u32 %v1389, 2147483648
    %v1404 = vor.u32 1.1754944e-38, %v1403
    %v1405 = vsel %vm1402, %v1404, %v1400
    %v1406 = vmul.f32 1.0, %v1405
    %v1407 = vrcp.pop %v1390
    %v1408 = vmul.f32 %v1390, %v1407
    %v1409 = vsub.f32 1.0, %v1408
    %v1410 = vmul.f32 %v1407, %v1409
    %v1411 = vadd.f32 %v1407, %v1410
    %vm1412 = vweird.f32 %v1390
    %vm1413 = vweird.f32 %v1407
    %vm1414 = vmor %vm1412, %vm1413
    %v1415 = vsel %vm1414, %v1407, %v1411
    %v1416 = vand.u32 2147483647, %v1390
    %vm1417 = vcmp.eq.f32.partialorder %v1416, 8.507059e+37
    %v1418 = vand.u32 %v1390, 2147483648
    %v1419 = vor.u32 1.1754944e-38, %v1418
    %v1420 = vsel %vm1417, %v1419, %v1415
    %v1421 = vmul.f32 1.0, %v1420
    %v1422 = vrcp.pop %v1391
    %v1423 = vmul.f32 %v1391, %v1422
    %v1424 = vsub.f32 1.0, %v1423
    %v1425 = vmul.f32 %v1422, %v1424
    %v1426 = vadd.f32 %v1422, %v1425
    %vm1427 = vweird.f32 %v1391
    %vm1428 = vweird.f32 %v1422
    %vm1429 = vmor %vm1427, %vm1428
    %v1430 = vsel %vm1429, %v1422, %v1426
    %v1431 = vand.u32 2147483647, %v1391
    %vm1432 = vcmp.eq.f32.partialorder %v1431, 8.507059e+37
    %v1433 = vand.u32 %v1391, 2147483648
    %v1434 = vor.u32 1.1754944e-38, %v1433
    %v1435 = vsel %vm1432, %v1434, %v1430
    %v1436 = vmul.f32 1.0, %v1435
    %v1437 = vtanh.pop %v1378
    %v1438 = vmul.f32 %v1421, %v1281
    %v1439 = vmul.f32 %v1406, %v1437
    %v1440 = vadd.f32 %v1438, %v1439
    %v1441 = vtanh.pop %v1440
    %v1442 = vmul.f32 %v1436, %v1441
    %1443 = vst [vmem:[%s7] sm:$0x3] %v1442
    %1444 = vst [vmem:[%s8] sm:$0x3] %v1440
    %v1445 = vld [vmem:[#allocation7] sm:$0xff]
    %v1446 = vld [vmem:[#allocation7 + $0x8] sm:$0xff]
    %v1447 = vld [vmem:[#allocation7 + $0x10] sm:$0xff]
    %v1448 = vld [vmem:[#allocation7 + $0x18] sm:$0xff]
    %v1449 = vld [vmem:[#allocation7 + $0x20] sm:$0xff]
    %v1450 = vld [vmem:[#allocation7 + $0x28] sm:$0xff]
    %v1451 = vld [vmem:[#allocation7 + $0x30] sm:$0xff]
    %v1452 = vld [vmem:[#allocation7 + $0x38] sm:$0xff]
    %v1453 = vld [vmem:[#allocation7 + $0x40] sm:$0xff]
    %v1454 = vld [vmem:[#allocation7 + $0x48] sm:$0xff]
    %v1455 = vld [vmem:[#allocation7 + $0x50] sm:$0xff]
    %v1456 = vld [vmem:[#allocation7 + $0x58] sm:$0xff]
    %v1457 = vld [vmem:[#allocation7 + $0x60] sm:$0xff]
    %v1458 = vld [vmem:[#allocation7 + $0x68] sm:$0xff]
    %v1459 = vld [vmem:[#allocation7 + $0x70] sm:$0xff]
    %v1460 = vld [vmem:[#allocation7 + $0x78] sm:$0xff]
    %v1461 = vld [vmem:[%s5] sm:$0x1]
    %v1463 = vperm.slane %v1461, 0
    %1465 = vmatpush.msra.mxu0 %v1460
    %1466 = vmatpush.msra.mxu0 %v1459
    %1467 = vmatpush.msra.mxu0 %v1458
    %1468 = vmatpush.msra.mxu0 %v1457
    %1469 = vmatpush.msra.mxu0 %v1456
    %1470 = vmatpush.msra.mxu0 %v1455
    %1471 = vmatpush.msra.mxu0 %v1454
    %1472 = vmatpush.msra.mxu0 %v1453
    %1473 = vmatpush.msra.mxu0 %v1452
    %1474 = vmatpush.msra.mxu0 %v1451
    %1475 = vmatpush.msra.mxu0 %v1450
    %1476 = vmatpush.msra.mxu0 %v1449
    %1477 = vmatpush.msra.mxu0 %v1448
    %1478 = vmatpush.msra.mxu0 %v1447
    %1479 = vmatpush.msra.mxu0 %v1446
    %1480 = vmatpush.msra.mxu0 %v1445
    %1481 = vmatmul.f32.gmra.mxu0 %v1442
    %v1482 = vpop.f32.mrf.mxu0
    %v1483 = vadd.f32 %v1463, %v1482
    %1484 = vdwg.mxu0
    %1485 = vst [vmem:[%s6] sm:$0x3] %v1483
    // Predicated region
    $region42: #{lstm_model_forward.1} parent=1 // pred_check
      _
    $region43: #{lstm_model_forward.1} parent=1 // pred_check_branch
      %1487 = sbr.rel (0) target = $region45
    $region44: #{lstm_model_forward.1} parent=1 // pred_region
      _
    $region45: #{lstm_model_forward.1} parent=1 // pred_fallthru
      _
    // Predicated region
    $region46: #{lstm_model_forward.1} parent=1 // pred_check
      _
    $region47: #{lstm_model_forward.1} parent=1 // pred_check_branch
      %1489 = sbr.rel (0) target = $region49
    $region48: #{lstm_model_forward.1} parent=1 // pred_region
      _
    $region49: #{lstm_model_forward.1} parent=1 // pred_fallthru
      _
    // Predicated region
    $region50: #{lstm_model_forward.1} parent=1 // pred_check
      _
    $region51: #{lstm_model_forward.1} parent=1 // pred_check_branch
      %1491 = sbr.rel (0) target = $region53
    $region52: #{lstm_model_forward.1} parent=1 // pred_region
      _
    $region53: #{lstm_model_forward.1} parent=1 // pred_fallthru
      _
    // Predicated region
    $region54: #{lstm_model_forward.1} parent=1 // pred_check
      _
    $region55: #{lstm_model_forward.1} parent=1 // pred_check_branch
      %1493 = sbr.rel (0) target = $region57
    $region56: #{lstm_model_forward.1} parent=1 // pred_region
      _
    $region57: #{lstm_model_forward.1} parent=1 // pred_fallthru
      _
    // Predicated region
    $region58: #{lstm_model_forward.1} parent=1 // pred_check
      _
    $region59: #{lstm_model_forward.1} parent=1 // pred_check_branch
      %1495 = sbr.rel (0) target = $region61
    $region60: #{lstm_model_forward.1} parent=1 // pred_region
      _
    $region61: #{lstm_model_forward.1} parent=1 // pred_fallthru
      _
    // Predicated region
    $region62: #{lstm_model_forward.1} parent=1 // pred_check
      _
    $region63: #{lstm_model_forward.1} parent=1 // pred_check_branch
      %1497 = sbr.rel (0) target = $region65
    $region64: #{lstm_model_forward.1} parent=1 // pred_region
      _
    $region65: #{lstm_model_forward.1} parent=1 // pred_fallthru
      _
    %1498 = vsyncpa [#allocation3], 1
    %1499 = vsyncpa [#allocation5], 1
    %1500 = vsyncpa [#allocation8], 1

</llo_original>
